<compile_context>
chip_gen: v5e
topology: v5e:2x2
jax: 0.10.0
libtpu: 0.0.40
codegen_flags: <defaults>
</compile_context>

<pallas_src>
import functools

import jax
import jax.numpy as jnp
from jax.experimental import pallas as pl
from jax.experimental.pallas import tpu as pltpu


# ----------------------------------------------------------------------------
# device-derived policy helpers
# ----------------------------------------------------------------------------
def _elementwise_dtype():
    """bf16 elementwise on chips with bf16 VALU/EUP (v6e, v7x); f32 otherwise."""
    try:
        kind = jax.devices()[0].device_kind.lower()
    except Exception:
        kind = ""
    if "v6" in kind or "v7" in kind:
        return jnp.bfloat16
    return jnp.float32


def _vmem_capacity_bytes():
    try:
        return int(pltpu.get_tpu_info().vmem_capacity_bytes)
    except Exception:
        return 64 << 20          # conservative fallback (v7x per-TensorCore)


def _pick_batch_tile(B, N, D, half, vmem_cap):
    """Rows per grid step = bt * N.  Feed the MXU as many rows as VMEM allows;
    bt > 1 (-> block-diagonal spatial weight) is only used for small N."""
    per_row = 24 * D + 28 * half                       # rough live bytes / row
    max_rows = max(8, min(int((vmem_cap // 2) // per_row), 2048))
    if N < 256:
        max_rows = min(max_rows, 512)                  # bounds kron(I_bt, W) waste
    bt = 1
    for cand in range(1, B + 1):
        if B % cand:
            continue
        if cand * N > max_rows:
            continue
        if cand != B and (cand * N) % 8 != 0:          # (8,128) block-shape rule
            continue
        bt = cand
    # v7x megacore: keep 2 grid steps only if each still carries >= 256 rows.
    if bt == B and B % 2 == 0 and (B // 2) * N >= 256 and ((B // 2) * N) % 8 == 0:
        bt = B // 2
    # fall back to a single full-array step if the row block would be misaligned
    if bt != B and (bt * N) % 8 != 0:
        bt = B
    return bt


# ----------------------------------------------------------------------------
# in-kernel math helpers
# ----------------------------------------------------------------------------
def _layernorm_f32(x, gamma, beta, eps=1e-5):
    # single-pass moments: E[x^2] - E[x]^2 (statistics stay f32)
    m1 = jnp.mean(x, axis=-1, keepdims=True)
    m2 = jnp.mean(x * x, axis=-1, keepdims=True)
    var = jnp.maximum(m2 - m1 * m1, 0.0)
    return (x - m1) * jax.lax.rsqrt(var + eps) * gamma + beta


_SQRT_2_OVER_PI = 0.7978845608028654


def _gelu_tanh(x):
    # tanh-form GELU; the polynomial stays in x.dtype (bf16 on v6e/v7x), the
    # tanh itself is evaluated in f32 for robust lowering on every TPU gen.
    # |tanh-GELU - erf-GELU| < 4e-4, well below the bf16 matmul noise.
    inner = _SQRT_2_OVER_PI * (x + 0.044715 * (x * x * x))
    t = jnp.tanh(inner.astype(jnp.float32)).astype(x.dtype)
    return 0.5 * x * (1.0 + t)


# ----------------------------------------------------------------------------
# fused gMLP block kernel (rows = bt*seq_len flattened rows per grid step)
# ----------------------------------------------------------------------------
def gmlp_block_kernel(x_ref, ln1_g_ref, ln1_b_ref,
                      w1r_ref, b1r_ref, w1g_ref, b1g_ref,
                      sgu_g_ref, sgu_b_ref, sgu_w_ref, sgu_bias_ref,
                      w2_ref, b2_ref, o_ref, *, ew):
    f32 = jnp.float32
    bf16 = jnp.bfloat16

    # --- PreNorm (f32 statistics) ---
    y = _layernorm_f32(x_ref[...], ln1_g_ref[...], ln1_b_ref[...])
    y_bf = y.astype(bf16)

    # --- proj_in split into res / gate halves (bf16 MXU, f32 accumulate),
    #     bias add + GELU in the elementwise dtype ---
    res = jnp.dot(y_bf, w1r_ref[...],
                  preferred_element_type=f32).astype(ew) + b1r_ref[...]
    gate = jnp.dot(y_bf, w1g_ref[...],
                   preferred_element_type=f32).astype(ew) + b1g_ref[...]
    res = _gelu_tanh(res)                                  # (rows, F/2)
    gate = _gelu_tanh(gate)                                # (rows, F/2)

    # --- SpatialGatingUnit (heads=1, causal=False, act=Identity) ---
    gate = _layernorm_f32(gate.astype(f32), sgu_g_ref[...], sgu_b_ref[...])
    # one wide MXU call: sgu_w_ref holds kron(I_bt, W) when bt > 1, so the
    # (rows, rows) @ (rows, F/2) dot applies W per batch element with no
    # in-kernel loop / transpose / concatenate.
    gate_sp = jnp.dot(sgu_w_ref[...], gate.astype(bf16),
                      preferred_element_type=f32).astype(ew) + sgu_bias_ref[...]
    sgu_out = gate_sp * res                                # act = Identity

    # --- proj_out + residual (residual re-read from the VMEM input buffer) ---
    out = jnp.dot(sgu_out.astype(bf16), w2_ref[...],
                  preferred_element_type=f32) + b2_ref[...]
    o_ref[...] = x_ref[...] + out


# ----------------------------------------------------------------------------
# wrapper
# ----------------------------------------------------------------------------
def _estimate_vmem_bytes(rows, D, half, ew_bytes, param_bytes):
    io = 2 * (2 * rows * D * 4)                     # double-buffered x / o tiles
    interm = rows * (3 * D * 4 + D * 2              # x, y, out f32 + y bf16
                     + 4 * half * ew_bytes          # res, gate, gate_sp, sgu_out
                     + 3 * half * 4)                # f32 LN temps / dot accum
    return io + 2 * param_bytes + interm


def gmlp_block(x, p):
    """One Residual(PreNorm(gMLPBlock)) layer.  x: (B, N, D) float32."""
    B, N, D = x.shape
    half = p["w1_res"].shape[1]
    F = 2 * half
    ew = _elementwise_dtype()
    ew_bytes = jnp.dtype(ew).itemsize

    vmem_cap = _vmem_capacity_bytes()
    bt = _pick_batch_tile(B, N, D, half, vmem_cap)
    grid = B // bt
    rows = bt * N

    # lane-dense 2-D, batch-major layout: block g covers batches [g*bt, (g+1)*bt)
    x2d = x.reshape(B * N, D)

    # spatial weight: block-diagonal expansion so the SGU is one dot per step
    if bt == 1:
        w_sp = p["sgu_w"]                                        # (N, N) bf16
    else:
        w_sp = jnp.kron(jnp.eye(bt, dtype=p["sgu_w"].dtype), p["sgu_w"])
    # SGU bias pre-broadcast (per output row, tiled over the batch tile)
    sgu_bias = jnp.broadcast_to(
        jnp.tile(p["sgu_bias"].reshape(N, 1), (bt, 1)), (rows, half)).astype(ew)
    # proj_in biases in the elementwise dtype (added right after the dots)
    b1r = p["b1_res"].astype(ew)
    b1g = p["b1_gate"].astype(ew)

    def const(arr):                  # grid-invariant (constant-index) 2-D input
        return pl.BlockSpec(arr.shape, lambda g: (0, 0))

    param_args = (p["ln1_g"], p["ln1_b"], p["w1_res"], b1r, p["w1_gate"], b1g,
                  p["sgu_g"], p["sgu_b"], w_sp, sgu_bias, p["w2"], p["b2"])
    param_bytes = sum(int(v.size) * v.dtype.itemsize for v in param_args)

    flops = (2 * B * N * D * F                   # proj_in (both halves)
             + 2 * grid * rows * rows * half     # spatial mix (incl. kron pad)
             + 2 * B * N * half * D)             # proj_out
    transcendentals = B * N * F                  # one tanh per GELU element
    bytes_accessed = 2 * B * N * D * 4 + param_bytes

    est = _estimate_vmem_bytes(rows, D, half, ew_bytes, param_bytes)
    vmem_limit = int(min(max(32 << 20, 2 * est), int(0.85 * vmem_cap)))

    grid_spec = pltpu.PrefetchScalarGridSpec(
        num_scalar_prefetch=0,
        grid=(grid,),
        in_specs=[pl.BlockSpec((rows, D), lambda g: (g, 0))]
                 + [const(a) for a in param_args],
        out_specs=pl.BlockSpec((rows, D), lambda g: (g, 0)),
    )

    out2d = pl.pallas_call(
        functools.partial(gmlp_block_kernel, ew=ew),
        out_shape=jax.ShapeDtypeStruct((B * N, D), jnp.float32),
        grid_spec=grid_spec,
        compiler_params=pltpu.CompilerParams(
            dimension_semantics=("parallel",),
            vmem_limit_bytes=vmem_limit),
        cost_estimate=pl.CostEstimate(
            flops=flops, transcendentals=transcendentals,
            bytes_accessed=bytes_accessed),
    )(x2d, *param_args)

    return out2d.reshape(B, N, D)


def gmlp_forward(x, layers):
    # eval mode: no stochastic depth; to_logits = Identity
    for p in layers:
        x = gmlp_block(x, p)
    return x


# ----------------------------------------------------------------------------
# deterministic parameter init (shapes match gMLPBlock.__init__; synthetic)
# ----------------------------------------------------------------------------
def init_layer(key, dim, dim_ff, seq_len):
    half = dim_ff // 2
    ks = jax.random.split(key, 4)
    init_eps = 1e-3 / seq_len
    f32 = jnp.float32
    # full proj_in Linear(dim, dim_ff) split at F/2 (== slicing the fused layer);
    # matmul weights are stored bf16 for the MXU.  NOTE: real torch Linear
    # weights are (out, in) and must be transposed to this (in, out) layout.
    w1 = jax.random.normal(ks[0], (dim, dim_ff), f32) * (dim ** -0.5)
    b1 = jax.random.normal(ks[1], (1, dim_ff), f32) * 0.01
    return dict(
        ln1_g=jnp.ones((1, dim), f32),
        ln1_b=jnp.zeros((1, dim), f32),
        w1_res=w1[:, :half].astype(jnp.bfloat16),
        b1_res=b1[:, :half],
        w1_gate=w1[:, half:].astype(jnp.bfloat16),
        b1_gate=b1[:, half:],
        sgu_g=jnp.ones((1, half), f32),
        sgu_b=jnp.zeros((1, half), f32),
        # SpatialGatingUnit: weight ~ U(-init_eps, init_eps), bias = ones
        sgu_w=jax.random.uniform(ks[2], (seq_len, seq_len), f32,
                                 minval=-init_eps,
                                 maxval=init_eps).astype(jnp.bfloat16),
        sgu_bias=jnp.ones((seq_len,), f32),
        w2=(jax.random.normal(ks[3], (half, dim), f32)
            * (half ** -0.5)).astype(jnp.bfloat16),
        b2=jnp.zeros((1, dim), f32),
    )


# ----------------------------------------------------------------------------
# pure-JAX f32 reference (erf GELU), same bf16-stored weights
# ----------------------------------------------------------------------------
def gmlp_block_ref(x, p):
    f32 = jnp.float32

    def ln(v, g, b, eps=1e-5):
        mu = jnp.mean(v, -1, keepdims=True)
        var = jnp.mean((v - mu) ** 2, -1, keepdims=True)
        return (v - mu) * jax.lax.rsqrt(var + eps) * g + b

    y = ln(x, p["ln1_g"], p["ln1_b"])
    res = jax.nn.gelu(y @ p["w1_res"].astype(f32) + p["b1_res"],
                      approximate=False)
    gate = jax.nn.gelu(y @ p["w1_gate"].astype(f32) + p["b1_gate"],
                       approximate=False)
    gate = ln(gate, p["sgu_g"], p["sgu_b"])
    gate = (jnp.einsum("bnd,mn->bmd", gate, p["sgu_w"].astype(f32))
            + p["sgu_bias"][None, :, None])
    out = (gate * res) @ p["w2"].astype(f32) + p["b2"]
    return x + out


if __name__ == "__main__":
    # Lane-dense small shapes: D and dim_ff//2 are multiples of 128 so the
    # output / F-split stores are unmasked.
    B, N, D = 2, 8, 128            # batch, seq_len, input_dim
    ff_mult, depth = 4, 2
    dim_ff = D * ff_mult           # 512 -> F/2 = 256

    key = jax.random.PRNGKey(0)
    kx, *klayers = jax.random.split(key, depth + 1)
    x = jax.random.normal(kx, (B, N, D), dtype=jnp.float32)
    layers = [init_layer(k, D, dim_ff, N) for k in klayers]

    out = jax.jit(gmlp_forward)(x, layers)
    jax.block_until_ready(out)

    ref = x
    for p in layers:
        ref = gmlp_block_ref(ref, p)

    assert out.shape == (B, N, D) and out.dtype == jnp.float32
    assert bool(jnp.isfinite(out).all())
    # bf16 matmuls / bf16 elementwise (v6e/v7x) + tanh-GELU vs f32 erf reference:
    # typical max-abs error is ~1e-2 over two layers; 0.15 leaves safe margin
    # while still catching any structural bug.
    max_err = float(jnp.max(jnp.abs(out - ref)))
    assert max_err < 0.15, f"kernel deviates from f32 reference: {max_err}"
    print("KERNEL_OK")
</pallas_src>

<mosaic_0001>
module attributes {stable_mosaic.version = 11 : i64} {
  func.func @gmlp_block_kernel(%arg0: i32, %arg1: memref<16x128xf32, #tpu.memory_space<vmem>>, %arg2: memref<1x128xf32, #tpu.memory_space<vmem>>, %arg3: memref<1x128xf32, #tpu.memory_space<vmem>>, %arg4: memref<128x256xbf16, #tpu.memory_space<vmem>>, %arg5: memref<1x256xf32, #tpu.memory_space<vmem>>, %arg6: memref<128x256xbf16, #tpu.memory_space<vmem>>, %arg7: memref<1x256xf32, #tpu.memory_space<vmem>>, %arg8: memref<1x256xf32, #tpu.memory_space<vmem>>, %arg9: memref<1x256xf32, #tpu.memory_space<vmem>>, %arg10: memref<16x16xbf16, #tpu.memory_space<vmem>>, %arg11: memref<16x256xf32, #tpu.memory_space<vmem>>, %arg12: memref<256x128xbf16, #tpu.memory_space<vmem>>, %arg13: memref<1x128xf32, #tpu.memory_space<vmem>>, %arg14: memref<16x128xf32, #tpu.memory_space<vmem>>) attributes {dimension_semantics = [#tpu.dimension_semantics<parallel>], iteration_bounds = array<i64: 1>, scalar_prefetch = 0 : i64, scratch_operands = 0 : i64, tpu.core_type = #tpu.core_type<tc>, window_params = [{transform_indices = @transform_0, window_bounds = array<i64: 16, 128>}, {pipeline_mode = #tpu.pipeline_mode<synchronous>, transform_indices = @transform_1, window_bounds = array<i64: 1, 128>}, {pipeline_mode = #tpu.pipeline_mode<synchronous>, transform_indices = @transform_2, window_bounds = array<i64: 1, 128>}, {pipeline_mode = #tpu.pipeline_mode<synchronous>, transform_indices = @transform_3, window_bounds = array<i64: 128, 256>}, {pipeline_mode = #tpu.pipeline_mode<synchronous>, transform_indices = @transform_4, window_bounds = array<i64: 1, 256>}, {pipeline_mode = #tpu.pipeline_mode<synchronous>, transform_indices = @transform_5, window_bounds = array<i64: 128, 256>}, {pipeline_mode = #tpu.pipeline_mode<synchronous>, transform_indices = @transform_6, window_bounds = array<i64: 1, 256>}, {pipeline_mode = #tpu.pipeline_mode<synchronous>, transform_indices = @transform_7, window_bounds = array<i64: 1, 256>}, {pipeline_mode = #tpu.pipeline_mode<synchronous>, transform_indices = @transform_8, window_bounds = array<i64: 1, 256>}, {pipeline_mode = #tpu.pipeline_mode<synchronous>, transform_indices = @transform_9, window_bounds = array<i64: 16, 16>}, {pipeline_mode = #tpu.pipeline_mode<synchronous>, transform_indices = @transform_10, window_bounds = array<i64: 16, 256>}, {pipeline_mode = #tpu.pipeline_mode<synchronous>, transform_indices = @transform_11, window_bounds = array<i64: 256, 128>}, {pipeline_mode = #tpu.pipeline_mode<synchronous>, transform_indices = @transform_12, window_bounds = array<i64: 1, 128>}, {transform_indices = @transform_13, window_bounds = array<i64: 16, 128>}]} {
    %c0 = arith.constant 0 : index
    %c0_0 = arith.constant 0 : index
    %0 = vector.load %arg1[%c0, %c0_0] : memref<16x128xf32, #tpu.memory_space<vmem>>, vector<16x128xf32>
    %c0_1 = arith.constant 0 : index
    %c0_2 = arith.constant 0 : index
    %1 = vector.load %arg2[%c0_1, %c0_2] : memref<1x128xf32, #tpu.memory_space<vmem>>, vector<1x128xf32>
    %c0_3 = arith.constant 0 : index
    %c0_4 = arith.constant 0 : index
    %2 = vector.load %arg3[%c0_3, %c0_4] : memref<1x128xf32, #tpu.memory_space<vmem>>, vector<1x128xf32>
    %cst = arith.constant dense<0.000000e+00> : vector<16xf32>
    %3 = vector.multi_reduction <add>, %0, %cst [1] : vector<16x128xf32> to vector<16xf32>
    %4 = vector.shape_cast %3 : vector<16xf32> to vector<16x1xf32>
    %cst_5 = arith.constant 1.280000e+02 : f32
    %5 = vector.broadcast %cst_5 : f32 to vector<16x1xf32>
    %6 = arith.divf %4, %5 : vector<16x1xf32>
    %7 = arith.mulf %0, %0 : vector<16x128xf32>
    %cst_6 = arith.constant dense<0.000000e+00> : vector<16xf32>
    %8 = vector.multi_reduction <add>, %7, %cst_6 [1] : vector<16x128xf32> to vector<16xf32>
    %9 = vector.shape_cast %8 : vector<16xf32> to vector<16x1xf32>
    %cst_7 = arith.constant 1.280000e+02 : f32
    %10 = vector.broadcast %cst_7 : f32 to vector<16x1xf32>
    %11 = arith.divf %9, %10 : vector<16x1xf32>
    %12 = arith.mulf %6, %6 : vector<16x1xf32>
    %13 = arith.subf %11, %12 : vector<16x1xf32>
    %cst_8 = arith.constant 0.000000e+00 : f32
    %14 = vector.broadcast %cst_8 : f32 to vector<16x1xf32>
    %15 = arith.maximumf %13, %14 : vector<16x1xf32>
    %16 = vector.broadcast %6 : vector<16x1xf32> to vector<16x128xf32>
    %17 = arith.subf %0, %16 : vector<16x128xf32>
    %cst_9 = arith.constant 9.99999974E-6 : f32
    %18 = vector.broadcast %cst_9 : f32 to vector<16x1xf32>
    %19 = arith.addf %15, %18 : vector<16x1xf32>
    %20 = math.rsqrt %19 : vector<16x1xf32>
    %21 = vector.broadcast %20 : vector<16x1xf32> to vector<16x128xf32>
    %22 = arith.mulf %17, %21 : vector<16x128xf32>
    %23 = vector.broadcast %1 : vector<1x128xf32> to vector<16x128xf32>
    %24 = arith.mulf %22, %23 : vector<16x128xf32>
    %25 = vector.broadcast %2 : vector<1x128xf32> to vector<16x128xf32>
    %26 = arith.addf %24, %25 : vector<16x128xf32>
    %27 = arith.truncf %26 : vector<16x128xf32> to vector<16x128xbf16>
    %c0_10 = arith.constant 0 : index
    %c0_11 = arith.constant 0 : index
    %28 = vector.load %arg4[%c0_10, %c0_11] : memref<128x256xbf16, #tpu.memory_space<vmem>>, vector<128x256xbf16>
    %cst_12 = arith.constant dense<0.000000e+00> : vector<16x256xf32>
    %29 = tpu.matmul %27, %28, %cst_12 {dimension_numbers = #tpu.dot_dimension_numbers<[1], [0], [0], [1], [0, 0, 1, 1], [], []>} : vector<16x128xbf16>, vector<128x256xbf16>, vector<16x256xf32> -> vector<16x256xf32>
    %c0_13 = arith.constant 0 : index
    %c0_14 = arith.constant 0 : index
    %30 = vector.load %arg5[%c0_13, %c0_14] : memref<1x256xf32, #tpu.memory_space<vmem>>, vector<1x256xf32>
    %31 = vector.broadcast %30 : vector<1x256xf32> to vector<16x256xf32>
    %32 = arith.addf %29, %31 : vector<16x256xf32>
    %c0_15 = arith.constant 0 : index
    %c0_16 = arith.constant 0 : index
    %33 = vector.load %arg6[%c0_15, %c0_16] : memref<128x256xbf16, #tpu.memory_space<vmem>>, vector<128x256xbf16>
    %cst_17 = arith.constant dense<0.000000e+00> : vector<16x256xf32>
    %34 = tpu.matmul %27, %33, %cst_17 {dimension_numbers = #tpu.dot_dimension_numbers<[1], [0], [0], [1], [0, 0, 1, 1], [], []>} : vector<16x128xbf16>, vector<128x256xbf16>, vector<16x256xf32> -> vector<16x256xf32>
    %c0_18 = arith.constant 0 : index
    %c0_19 = arith.constant 0 : index
    %35 = vector.load %arg7[%c0_18, %c0_19] : memref<1x256xf32, #tpu.memory_space<vmem>>, vector<1x256xf32>
    %36 = vector.broadcast %35 : vector<1x256xf32> to vector<16x256xf32>
    %37 = arith.addf %34, %36 : vector<16x256xf32>
    %38 = arith.mulf %32, %32 : vector<16x256xf32>
    %39 = arith.mulf %38, %32 : vector<16x256xf32>
    %cst_20 = arith.constant 4.471500e-02 : f32
    %40 = vector.broadcast %cst_20 : f32 to vector<16x256xf32>
    %41 = arith.mulf %40, %39 : vector<16x256xf32>
    %42 = arith.addf %32, %41 : vector<16x256xf32>
    %cst_21 = arith.constant 0.797884583 : f32
    %43 = vector.broadcast %cst_21 : f32 to vector<16x256xf32>
    %44 = arith.mulf %43, %42 : vector<16x256xf32>
    %45 = math.tanh %44 : vector<16x256xf32>
    %cst_22 = arith.constant 5.000000e-01 : f32
    %46 = vector.broadcast %cst_22 : f32 to vector<16x256xf32>
    %47 = arith.mulf %46, %32 : vector<16x256xf32>
    %cst_23 = arith.constant 1.000000e+00 : f32
    %48 = vector.broadcast %cst_23 : f32 to vector<16x256xf32>
    %49 = arith.addf %48, %45 : vector<16x256xf32>
    %50 = arith.mulf %47, %49 : vector<16x256xf32>
    %51 = arith.mulf %37, %37 : vector<16x256xf32>
    %52 = arith.mulf %51, %37 : vector<16x256xf32>
    %cst_24 = arith.constant 4.471500e-02 : f32
    %53 = vector.broadcast %cst_24 : f32 to vector<16x256xf32>
    %54 = arith.mulf %53, %52 : vector<16x256xf32>
    %55 = arith.addf %37, %54 : vector<16x256xf32>
    %cst_25 = arith.constant 0.797884583 : f32
    %56 = vector.broadcast %cst_25 : f32 to vector<16x256xf32>
    %57 = arith.mulf %56, %55 : vector<16x256xf32>
    %58 = math.tanh %57 : vector<16x256xf32>
    %cst_26 = arith.constant 5.000000e-01 : f32
    %59 = vector.broadcast %cst_26 : f32 to vector<16x256xf32>
    %60 = arith.mulf %59, %37 : vector<16x256xf32>
    %cst_27 = arith.constant 1.000000e+00 : f32
    %61 = vector.broadcast %cst_27 : f32 to vector<16x256xf32>
    %62 = arith.addf %61, %58 : vector<16x256xf32>
    %63 = arith.mulf %60, %62 : vector<16x256xf32>
    %c0_28 = arith.constant 0 : index
    %c0_29 = arith.constant 0 : index
    %64 = vector.load %arg8[%c0_28, %c0_29] : memref<1x256xf32, #tpu.memory_space<vmem>>, vector<1x256xf32>
    %c0_30 = arith.constant 0 : index
    %c0_31 = arith.constant 0 : index
    %65 = vector.load %arg9[%c0_30, %c0_31] : memref<1x256xf32, #tpu.memory_space<vmem>>, vector<1x256xf32>
    %cst_32 = arith.constant dense<0.000000e+00> : vector<16xf32>
    %66 = vector.multi_reduction <add>, %63, %cst_32 [1] : vector<16x256xf32> to vector<16xf32>
    %67 = vector.shape_cast %66 : vector<16xf32> to vector<16x1xf32>
    %cst_33 = arith.constant 2.560000e+02 : f32
    %68 = vector.broadcast %cst_33 : f32 to vector<16x1xf32>
    %69 = arith.divf %67, %68 : vector<16x1xf32>
    %70 = arith.mulf %63, %63 : vector<16x256xf32>
    %cst_34 = arith.constant dense<0.000000e+00> : vector<16xf32>
    %71 = vector.multi_reduction <add>, %70, %cst_34 [1] : vector<16x256xf32> to vector<16xf32>
    %72 = vector.shape_cast %71 : vector<16xf32> to vector<16x1xf32>
    %cst_35 = arith.constant 2.560000e+02 : f32
    %73 = vector.broadcast %cst_35 : f32 to vector<16x1xf32>
    %74 = arith.divf %72, %73 : vector<16x1xf32>
    %75 = arith.mulf %69, %69 : vector<16x1xf32>
    %76 = arith.subf %74, %75 : vector<16x1xf32>
    %cst_36 = arith.constant 0.000000e+00 : f32
    %77 = vector.broadcast %cst_36 : f32 to vector<16x1xf32>
    %78 = arith.maximumf %76, %77 : vector<16x1xf32>
    %79 = vector.broadcast %69 : vector<16x1xf32> to vector<16x256xf32>
    %80 = arith.subf %63, %79 : vector<16x256xf32>
    %cst_37 = arith.constant 9.99999974E-6 : f32
    %81 = vector.broadcast %cst_37 : f32 to vector<16x1xf32>
    %82 = arith.addf %78, %81 : vector<16x1xf32>
    %83 = math.rsqrt %82 : vector<16x1xf32>
    %84 = vector.broadcast %83 : vector<16x1xf32> to vector<16x256xf32>
    %85 = arith.mulf %80, %84 : vector<16x256xf32>
    %86 = vector.broadcast %64 : vector<1x256xf32> to vector<16x256xf32>
    %87 = arith.mulf %85, %86 : vector<16x256xf32>
    %88 = vector.broadcast %65 : vector<1x256xf32> to vector<16x256xf32>
    %89 = arith.addf %87, %88 : vector<16x256xf32>
    %c0_38 = arith.constant 0 : index
    %c0_39 = arith.constant 0 : index
    %90 = vector.load %arg10[%c0_38, %c0_39] : memref<16x16xbf16, #tpu.memory_space<vmem>>, vector<16x16xbf16>
    %91 = arith.truncf %89 : vector<16x256xf32> to vector<16x256xbf16>
    %cst_40 = arith.constant dense<0.000000e+00> : vector<16x256xf32>
    %92 = tpu.matmul %90, %91, %cst_40 {dimension_numbers = #tpu.dot_dimension_numbers<[1], [0], [0], [1], [0, 0, 1, 1], [], []>} : vector<16x16xbf16>, vector<16x256xbf16>, vector<16x256xf32> -> vector<16x256xf32>
    %c0_41 = arith.constant 0 : index
    %c0_42 = arith.constant 0 : index
    %93 = vector.load %arg11[%c0_41, %c0_42] : memref<16x256xf32, #tpu.memory_space<vmem>>, vector<16x256xf32>
    %94 = arith.addf %92, %93 : vector<16x256xf32>
    %95 = arith.mulf %94, %50 : vector<16x256xf32>
    %96 = arith.truncf %95 : vector<16x256xf32> to vector<16x256xbf16>
    %c0_43 = arith.constant 0 : index
    %c0_44 = arith.constant 0 : index
    %97 = vector.load %arg12[%c0_43, %c0_44] : memref<256x128xbf16, #tpu.memory_space<vmem>>, vector<256x128xbf16>
    %cst_45 = arith.constant dense<0.000000e+00> : vector<16x128xf32>
    %98 = tpu.matmul %96, %97, %cst_45 {dimension_numbers = #tpu.dot_dimension_numbers<[1], [0], [0], [1], [0, 0, 1, 1], [], []>} : vector<16x256xbf16>, vector<256x128xbf16>, vector<16x128xf32> -> vector<16x128xf32>
    %c0_46 = arith.constant 0 : index
    %c0_47 = arith.constant 0 : index
    %99 = vector.load %arg13[%c0_46, %c0_47] : memref<1x128xf32, #tpu.memory_space<vmem>>, vector<1x128xf32>
    %100 = vector.broadcast %99 : vector<1x128xf32> to vector<16x128xf32>
    %101 = arith.addf %98, %100 : vector<16x128xf32>
    %c0_48 = arith.constant 0 : index
    %c0_49 = arith.constant 0 : index
    %102 = vector.load %arg1[%c0_48, %c0_49] : memref<16x128xf32, #tpu.memory_space<vmem>>, vector<16x128xf32>
    %103 = arith.addf %102, %101 : vector<16x128xf32>
    %c0_50 = arith.constant 0 : index
    %c0_51 = arith.constant 0 : index
    %104 = vector.load %arg14[%c0_50, %c0_51] : memref<16x128xf32, #tpu.memory_space<vmem>>, vector<16x128xf32>
    tpu.vector_store %arg14[%c0_50, %c0_51], %103 {strides = array<i32>} : memref<16x128xf32, #tpu.memory_space<vmem>>, vector<16x128xf32>,
    return
  }
  func.func @transform_0(%arg0: i32) -> (i32, i32) {
    %c0_i32 = arith.constant 0 : i32
    %c0_i32_0 = arith.constant 0 : i32
    return %arg0, %c0_i32 : i32, i32
  }
  func.func @transform_1(%arg0: i32) -> (i32, i32) {
    %c0_i32 = arith.constant 0 : i32
    %c0_i32_0 = arith.constant 0 : i32
    %c0_i32_1 = arith.constant 0 : i32
    return %c0_i32, %c0_i32_0 : i32, i32
  }
  func.func @transform_2(%arg0: i32) -> (i32, i32) {
    %c0_i32 = arith.constant 0 : i32
    %c0_i32_0 = arith.constant 0 : i32
    %c0_i32_1 = arith.constant 0 : i32
    return %c0_i32, %c0_i32_0 : i32, i32
  }
  func.func @transform_3(%arg0: i32) -> (i32, i32) {
    %c0_i32 = arith.constant 0 : i32
    %c0_i32_0 = arith.constant 0 : i32
    %c0_i32_1 = arith.constant 0 : i32
    return %c0_i32, %c0_i32_0 : i32, i32
  }
  func.func @transform_4(%arg0: i32) -> (i32, i32) {
    %c0_i32 = arith.constant 0 : i32
    %c0_i32_0 = arith.constant 0 : i32
    %c0_i32_1 = arith.constant 0 : i32
    return %c0_i32, %c0_i32_0 : i32, i32
  }
  func.func @transform_5(%arg0: i32) -> (i32, i32) {
    %c0_i32 = arith.constant 0 : i32
    %c0_i32_0 = arith.constant 0 : i32
    %c0_i32_1 = arith.constant 0 : i32
    return %c0_i32, %c0_i32_0 : i32, i32
  }
  func.func @transform_6(%arg0: i32) -> (i32, i32) {
    %c0_i32 = arith.constant 0 : i32
    %c0_i32_0 = arith.constant 0 : i32
    %c0_i32_1 = arith.constant 0 : i32
    return %c0_i32, %c0_i32_0 : i32, i32
  }
  func.func @transform_7(%arg0: i32) -> (i32, i32) {
    %c0_i32 = arith.constant 0 : i32
    %c0_i32_0 = arith.constant 0 : i32
    %c0_i32_1 = arith.constant 0 : i32
    return %c0_i32, %c0_i32_0 : i32, i32
  }
  func.func @transform_8(%arg0: i32) -> (i32, i32) {
    %c0_i32 = arith.constant 0 : i32
    %c0_i32_0 = arith.constant 0 : i32
    %c0_i32_1 = arith.constant 0 : i32
    return %c0_i32, %c0_i32_0 : i32, i32
  }
  func.func @transform_9(%arg0: i32) -> (i32, i32) {
    %c0_i32 = arith.constant 0 : i32
    %c0_i32_0 = arith.constant 0 : i32
    %c0_i32_1 = arith.constant 0 : i32
    return %c0_i32, %c0_i32_0 : i32, i32
  }
  func.func @transform_10(%arg0: i32) -> (i32, i32) {
    %c0_i32 = arith.constant 0 : i32
    %c0_i32_0 = arith.constant 0 : i32
    %c0_i32_1 = arith.constant 0 : i32
    return %c0_i32, %c0_i32_0 : i32, i32
  }
  func.func @transform_11(%arg0: i32) -> (i32, i32) {
    %c0_i32 = arith.constant 0 : i32
    %c0_i32_0 = arith.constant 0 : i32
    %c0_i32_1 = arith.constant 0 : i32
    return %c0_i32, %c0_i32_0 : i32, i32
  }
  func.func @transform_12(%arg0: i32) -> (i32, i32) {
    %c0_i32 = arith.constant 0 : i32
    %c0_i32_0 = arith.constant 0 : i32
    %c0_i32_1 = arith.constant 0 : i32
    return %c0_i32, %c0_i32_0 : i32, i32
  }
  func.func @transform_13(%arg0: i32) -> (i32, i32) {
    %c0_i32 = arith.constant 0 : i32
    %c0_i32_0 = arith.constant 0 : i32
    return %arg0, %c0_i32 : i32, i32
  }
}

module attributes {stable_mosaic.version = 11 : i64} {
  func.func @gmlp_block_kernel(%arg0: i32, %arg1: memref<16x128xf32, #tpu.memory_space<vmem>>, %arg2: memref<1x128xf32, #tpu.memory_space<vmem>>, %arg3: memref<1x128xf32, #tpu.memory_space<vmem>>, %arg4: memref<128x256xbf16, #tpu.memory_space<vmem>>, %arg5: memref<1x256xf32, #tpu.memory_space<vmem>>, %arg6: memref<128x256xbf16, #tpu.memory_space<vmem>>, %arg7: memref<1x256xf32, #tpu.memory_space<vmem>>, %arg8: memref<1x256xf32, #tpu.memory_space<vmem>>, %arg9: memref<1x256xf32, #tpu.memory_space<vmem>>, %arg10: memref<16x16xbf16, #tpu.memory_space<vmem>>, %arg11: memref<16x256xf32, #tpu.memory_space<vmem>>, %arg12: memref<256x128xbf16, #tpu.memory_space<vmem>>, %arg13: memref<1x128xf32, #tpu.memory_space<vmem>>, %arg14: memref<16x128xf32, #tpu.memory_space<vmem>>) attributes {dimension_semantics = [#tpu.dimension_semantics<parallel>], iteration_bounds = array<i64: 1>, scalar_prefetch = 0 : i64, scratch_operands = 0 : i64, tpu.core_type = #tpu.core_type<tc>, window_params = [{transform_indices = @transform_0, window_bounds = array<i64: 16, 128>}, {pipeline_mode = #tpu.pipeline_mode<synchronous>, transform_indices = @transform_1, window_bounds = array<i64: 1, 128>}, {pipeline_mode = #tpu.pipeline_mode<synchronous>, transform_indices = @transform_2, window_bounds = array<i64: 1, 128>}, {pipeline_mode = #tpu.pipeline_mode<synchronous>, transform_indices = @transform_3, window_bounds = array<i64: 128, 256>}, {pipeline_mode = #tpu.pipeline_mode<synchronous>, transform_indices = @transform_4, window_bounds = array<i64: 1, 256>}, {pipeline_mode = #tpu.pipeline_mode<synchronous>, transform_indices = @transform_5, window_bounds = array<i64: 128, 256>}, {pipeline_mode = #tpu.pipeline_mode<synchronous>, transform_indices = @transform_6, window_bounds = array<i64: 1, 256>}, {pipeline_mode = #tpu.pipeline_mode<synchronous>, transform_indices = @transform_7, window_bounds = array<i64: 1, 256>}, {pipeline_mode = #tpu.pipeline_mode<synchronous>, transform_indices = @transform_8, window_bounds = array<i64: 1, 256>}, {pipeline_mode = #tpu.pipeline_mode<synchronous>, transform_indices = @transform_9, window_bounds = array<i64: 16, 16>}, {pipeline_mode = #tpu.pipeline_mode<synchronous>, transform_indices = @transform_10, window_bounds = array<i64: 16, 256>}, {pipeline_mode = #tpu.pipeline_mode<synchronous>, transform_indices = @transform_11, window_bounds = array<i64: 256, 128>}, {pipeline_mode = #tpu.pipeline_mode<synchronous>, transform_indices = @transform_12, window_bounds = array<i64: 1, 128>}, {transform_indices = @transform_13, window_bounds = array<i64: 16, 128>}]} {
    %c0 = arith.constant 0 : index
    %c0_0 = arith.constant 0 : index
    %0 = vector.load %arg1[%c0, %c0_0] : memref<16x128xf32, #tpu.memory_space<vmem>>, vector<16x128xf32>
    %c0_1 = arith.constant 0 : index
    %c0_2 = arith.constant 0 : index
    %1 = vector.load %arg2[%c0_1, %c0_2] : memref<1x128xf32, #tpu.memory_space<vmem>>, vector<1x128xf32>
    %c0_3 = arith.constant 0 : index
    %c0_4 = arith.constant 0 : index
    %2 = vector.load %arg3[%c0_3, %c0_4] : memref<1x128xf32, #tpu.memory_space<vmem>>, vector<1x128xf32>
    %cst = arith.constant dense<0.000000e+00> : vector<16xf32>
    %3 = vector.multi_reduction <add>, %0, %cst [1] : vector<16x128xf32> to vector<16xf32>
    %4 = vector.shape_cast %3 : vector<16xf32> to vector<16x1xf32>
    %cst_5 = arith.constant 1.280000e+02 : f32
    %5 = vector.broadcast %cst_5 : f32 to vector<16x1xf32>
    %6 = arith.divf %4, %5 : vector<16x1xf32>
    %7 = arith.mulf %0, %0 : vector<16x128xf32>
    %cst_6 = arith.constant dense<0.000000e+00> : vector<16xf32>
    %8 = vector.multi_reduction <add>, %7, %cst_6 [1] : vector<16x128xf32> to vector<16xf32>
    %9 = vector.shape_cast %8 : vector<16xf32> to vector<16x1xf32>
    %cst_7 = arith.constant 1.280000e+02 : f32
    %10 = vector.broadcast %cst_7 : f32 to vector<16x1xf32>
    %11 = arith.divf %9, %10 : vector<16x1xf32>
    %12 = arith.mulf %6, %6 : vector<16x1xf32>
    %13 = arith.subf %11, %12 : vector<16x1xf32>
    %cst_8 = arith.constant 0.000000e+00 : f32
    %14 = vector.broadcast %cst_8 : f32 to vector<16x1xf32>
    %15 = arith.maximumf %13, %14 : vector<16x1xf32>
    %16 = vector.broadcast %6 : vector<16x1xf32> to vector<16x128xf32>
    %17 = arith.subf %0, %16 : vector<16x128xf32>
    %cst_9 = arith.constant 9.99999974E-6 : f32
    %18 = vector.broadcast %cst_9 : f32 to vector<16x1xf32>
    %19 = arith.addf %15, %18 : vector<16x1xf32>
    %20 = math.rsqrt %19 : vector<16x1xf32>
    %21 = vector.broadcast %20 : vector<16x1xf32> to vector<16x128xf32>
    %22 = arith.mulf %17, %21 : vector<16x128xf32>
    %23 = vector.broadcast %1 : vector<1x128xf32> to vector<16x128xf32>
    %24 = arith.mulf %22, %23 : vector<16x128xf32>
    %25 = vector.broadcast %2 : vector<1x128xf32> to vector<16x128xf32>
    %26 = arith.addf %24, %25 : vector<16x128xf32>
    %27 = arith.truncf %26 : vector<16x128xf32> to vector<16x128xbf16>
    %c0_10 = arith.constant 0 : index
    %c0_11 = arith.constant 0 : index
    %28 = vector.load %arg4[%c0_10, %c0_11] : memref<128x256xbf16, #tpu.memory_space<vmem>>, vector<128x256xbf16>
    %cst_12 = arith.constant dense<0.000000e+00> : vector<16x256xf32>
    %29 = tpu.matmul %27, %28, %cst_12 {dimension_numbers = #tpu.dot_dimension_numbers<[1], [0], [0], [1], [0, 0, 1, 1], [], []>} : vector<16x128xbf16>, vector<128x256xbf16>, vector<16x256xf32> -> vector<16x256xf32>
    %c0_13 = arith.constant 0 : index
    %c0_14 = arith.constant 0 : index
    %30 = vector.load %arg5[%c0_13, %c0_14] : memref<1x256xf32, #tpu.memory_space<vmem>>, vector<1x256xf32>
    %31 = vector.broadcast %30 : vector<1x256xf32> to vector<16x256xf32>
    %32 = arith.addf %29, %31 : vector<16x256xf32>
    %c0_15 = arith.constant 0 : index
    %c0_16 = arith.constant 0 : index
    %33 = vector.load %arg6[%c0_15, %c0_16] : memref<128x256xbf16, #tpu.memory_space<vmem>>, vector<128x256xbf16>
    %cst_17 = arith.constant dense<0.000000e+00> : vector<16x256xf32>
    %34 = tpu.matmul %27, %33, %cst_17 {dimension_numbers = #tpu.dot_dimension_numbers<[1], [0], [0], [1], [0, 0, 1, 1], [], []>} : vector<16x128xbf16>, vector<128x256xbf16>, vector<16x256xf32> -> vector<16x256xf32>
    %c0_18 = arith.constant 0 : index
    %c0_19 = arith.constant 0 : index
    %35 = vector.load %arg7[%c0_18, %c0_19] : memref<1x256xf32, #tpu.memory_space<vmem>>, vector<1x256xf32>
    %36 = vector.broadcast %35 : vector<1x256xf32> to vector<16x256xf32>
    %37 = arith.addf %34, %36 : vector<16x256xf32>
    %38 = arith.mulf %32, %32 : vector<16x256xf32>
    %39 = arith.mulf %38, %32 : vector<16x256xf32>
    %cst_20 = arith.constant 4.471500e-02 : f32
    %40 = vector.broadcast %cst_20 : f32 to vector<16x256xf32>
    %41 = arith.mulf %40, %39 : vector<16x256xf32>
    %42 = arith.addf %32, %41 : vector<16x256xf32>
    %cst_21 = arith.constant 0.797884583 : f32
    %43 = vector.broadcast %cst_21 : f32 to vector<16x256xf32>
    %44 = arith.mulf %43, %42 : vector<16x256xf32>
    %45 = math.tanh %44 : vector<16x256xf32>
    %cst_22 = arith.constant 5.000000e-01 : f32
    %46 = vector.broadcast %cst_22 : f32 to vector<16x256xf32>
    %47 = arith.mulf %46, %32 : vector<16x256xf32>
    %cst_23 = arith.constant 1.000000e+00 : f32
    %48 = vector.broadcast %cst_23 : f32 to vector<16x256xf32>
    %49 = arith.addf %48, %45 : vector<16x256xf32>
    %50 = arith.mulf %47, %49 : vector<16x256xf32>
    %51 = arith.mulf %37, %37 : vector<16x256xf32>
    %52 = arith.mulf %51, %37 : vector<16x256xf32>
    %cst_24 = arith.constant 4.471500e-02 : f32
    %53 = vector.broadcast %cst_24 : f32 to vector<16x256xf32>
    %54 = arith.mulf %53, %52 : vector<16x256xf32>
    %55 = arith.addf %37, %54 : vector<16x256xf32>
    %cst_25 = arith.constant 0.797884583 : f32
    %56 = vector.broadcast %cst_25 : f32 to vector<16x256xf32>
    %57 = arith.mulf %56, %55 : vector<16x256xf32>
    %58 = math.tanh %57 : vector<16x256xf32>
    %cst_26 = arith.constant 5.000000e-01 : f32
    %59 = vector.broadcast %cst_26 : f32 to vector<16x256xf32>
    %60 = arith.mulf %59, %37 : vector<16x256xf32>
    %cst_27 = arith.constant 1.000000e+00 : f32
    %61 = vector.broadcast %cst_27 : f32 to vector<16x256xf32>
    %62 = arith.addf %61, %58 : vector<16x256xf32>
    %63 = arith.mulf %60, %62 : vector<16x256xf32>
    %c0_28 = arith.constant 0 : index
    %c0_29 = arith.constant 0 : index
    %64 = vector.load %arg8[%c0_28, %c0_29] : memref<1x256xf32, #tpu.memory_space<vmem>>, vector<1x256xf32>
    %c0_30 = arith.constant 0 : index
    %c0_31 = arith.constant 0 : index
    %65 = vector.load %arg9[%c0_30, %c0_31] : memref<1x256xf32, #tpu.memory_space<vmem>>, vector<1x256xf32>
    %cst_32 = arith.constant dense<0.000000e+00> : vector<16xf32>
    %66 = vector.multi_reduction <add>, %63, %cst_32 [1] : vector<16x256xf32> to vector<16xf32>
    %67 = vector.shape_cast %66 : vector<16xf32> to vector<16x1xf32>
    %cst_33 = arith.constant 2.560000e+02 : f32
    %68 = vector.broadcast %cst_33 : f32 to vector<16x1xf32>
    %69 = arith.divf %67, %68 : vector<16x1xf32>
    %70 = arith.mulf %63, %63 : vector<16x256xf32>
    %cst_34 = arith.constant dense<0.000000e+00> : vector<16xf32>
    %71 = vector.multi_reduction <add>, %70, %cst_34 [1] : vector<16x256xf32> to vector<16xf32>
    %72 = vector.shape_cast %71 : vector<16xf32> to vector<16x1xf32>
    %cst_35 = arith.constant 2.560000e+02 : f32
    %73 = vector.broadcast %cst_35 : f32 to vector<16x1xf32>
    %74 = arith.divf %72, %73 : vector<16x1xf32>
    %75 = arith.mulf %69, %69 : vector<16x1xf32>
    %76 = arith.subf %74, %75 : vector<16x1xf32>
    %cst_36 = arith.constant 0.000000e+00 : f32
    %77 = vector.broadcast %cst_36 : f32 to vector<16x1xf32>
    %78 = arith.maximumf %76, %77 : vector<16x1xf32>
    %79 = vector.broadcast %69 : vector<16x1xf32> to vector<16x256xf32>
    %80 = arith.subf %63, %79 : vector<16x256xf32>
    %cst_37 = arith.constant 9.99999974E-6 : f32
    %81 = vector.broadcast %cst_37 : f32 to vector<16x1xf32>
    %82 = arith.addf %78, %81 : vector<16x1xf32>
    %83 = math.rsqrt %82 : vector<16x1xf32>
    %84 = vector.broadcast %83 : vector<16x1xf32> to vector<16x256xf32>
    %85 = arith.mulf %80, %84 : vector<16x256xf32>
    %86 = vector.broadcast %64 : vector<1x256xf32> to vector<16x256xf32>
    %87 = arith.mulf %85, %86 : vector<16x256xf32>
    %88 = vector.broadcast %65 : vector<1x256xf32> to vector<16x256xf32>
    %89 = arith.addf %87, %88 : vector<16x256xf32>
    %c0_38 = arith.constant 0 : index
    %c0_39 = arith.constant 0 : index
    %90 = vector.load %arg10[%c0_38, %c0_39] : memref<16x16xbf16, #tpu.memory_space<vmem>>, vector<16x16xbf16>
    %91 = arith.truncf %89 : vector<16x256xf32> to vector<16x256xbf16>
    %cst_40 = arith.constant dense<0.000000e+00> : vector<16x256xf32>
    %92 = tpu.matmul %90, %91, %cst_40 {dimension_numbers = #tpu.dot_dimension_numbers<[1], [0], [0], [1], [0, 0, 1, 1], [], []>} : vector<16x16xbf16>, vector<16x256xbf16>, vector<16x256xf32> -> vector<16x256xf32>
    %c0_41 = arith.constant 0 : index
    %c0_42 = arith.constant 0 : index
    %93 = vector.load %arg11[%c0_41, %c0_42] : memref<16x256xf32, #tpu.memory_space<vmem>>, vector<16x256xf32>
    %94 = arith.addf %92, %93 : vector<16x256xf32>
    %95 = arith.mulf %94, %50 : vector<16x256xf32>
    %96 = arith.truncf %95 : vector<16x256xf32> to vector<16x256xbf16>
    %c0_43 = arith.constant 0 : index
    %c0_44 = arith.constant 0 : index
    %97 = vector.load %arg12[%c0_43, %c0_44] : memref<256x128xbf16, #tpu.memory_space<vmem>>, vector<256x128xbf16>
    %cst_45 = arith.constant dense<0.000000e+00> : vector<16x128xf32>
    %98 = tpu.matmul %96, %97, %cst_45 {dimension_numbers = #tpu.dot_dimension_numbers<[1], [0], [0], [1], [0, 0, 1, 1], [], []>} : vector<16x256xbf16>, vector<256x128xbf16>, vector<16x128xf32> -> vector<16x128xf32>
    %c0_46 = arith.constant 0 : index
    %c0_47 = arith.constant 0 : index
    %99 = vector.load %arg13[%c0_46, %c0_47] : memref<1x128xf32, #tpu.memory_space<vmem>>, vector<1x128xf32>
    %100 = vector.broadcast %99 : vector<1x128xf32> to vector<16x128xf32>
    %101 = arith.addf %98, %100 : vector<16x128xf32>
    %c0_48 = arith.constant 0 : index
    %c0_49 = arith.constant 0 : index
    %102 = vector.load %arg1[%c0_48, %c0_49] : memref<16x128xf32, #tpu.memory_space<vmem>>, vector<16x128xf32>
    %103 = arith.addf %102, %101 : vector<16x128xf32>
    %c0_50 = arith.constant 0 : index
    %c0_51 = arith.constant 0 : index
    %104 = vector.load %arg14[%c0_50, %c0_51] : memref<16x128xf32, #tpu.memory_space<vmem>>, vector<16x128xf32>
    tpu.vector_store %arg14[%c0_50, %c0_51], %103 {strides = array<i32>} : memref<16x128xf32, #tpu.memory_space<vmem>>, vector<16x128xf32>,
    return
  }
  func.func @transform_0(%arg0: i32) -> (i32, i32) {
    %c0_i32 = arith.constant 0 : i32
    %c0_i32_0 = arith.constant 0 : i32
    return %arg0, %c0_i32 : i32, i32
  }
  func.func @transform_1(%arg0: i32) -> (i32, i32) {
    %c0_i32 = arith.constant 0 : i32
    %c0_i32_0 = arith.constant 0 : i32
    %c0_i32_1 = arith.constant 0 : i32
    return %c0_i32, %c0_i32_0 : i32, i32
  }
  func.func @transform_2(%arg0: i32) -> (i32, i32) {
    %c0_i32 = arith.constant 0 : i32
    %c0_i32_0 = arith.constant 0 : i32
    %c0_i32_1 = arith.constant 0 : i32
    return %c0_i32, %c0_i32_0 : i32, i32
  }
  func.func @transform_3(%arg0: i32) -> (i32, i32) {
    %c0_i32 = arith.constant 0 : i32
    %c0_i32_0 = arith.constant 0 : i32
    %c0_i32_1 = arith.constant 0 : i32
    return %c0_i32, %c0_i32_0 : i32, i32
  }
  func.func @transform_4(%arg0: i32) -> (i32, i32) {
    %c0_i32 = arith.constant 0 : i32
    %c0_i32_0 = arith.constant 0 : i32
    %c0_i32_1 = arith.constant 0 : i32
    return %c0_i32, %c0_i32_0 : i32, i32
  }
  func.func @transform_5(%arg0: i32) -> (i32, i32) {
    %c0_i32 = arith.constant 0 : i32
    %c0_i32_0 = arith.constant 0 : i32
    %c0_i32_1 = arith.constant 0 : i32
    return %c0_i32, %c0_i32_0 : i32, i32
  }
  func.func @transform_6(%arg0: i32) -> (i32, i32) {
    %c0_i32 = arith.constant 0 : i32
    %c0_i32_0 = arith.constant 0 : i32
    %c0_i32_1 = arith.constant 0 : i32
    return %c0_i32, %c0_i32_0 : i32, i32
  }
  func.func @transform_7(%arg0: i32) -> (i32, i32) {
    %c0_i32 = arith.constant 0 : i32
    %c0_i32_0 = arith.constant 0 : i32
    %c0_i32_1 = arith.constant 0 : i32
    return %c0_i32, %c0_i32_0 : i32, i32
  }
  func.func @transform_8(%arg0: i32) -> (i32, i32) {
    %c0_i32 = arith.constant 0 : i32
    %c0_i32_0 = arith.constant 0 : i32
    %c0_i32_1 = arith.constant 0 : i32
    return %c0_i32, %c0_i32_0 : i32, i32
  }
  func.func @transform_9(%arg0: i32) -> (i32, i32) {
    %c0_i32 = arith.constant 0 : i32
    %c0_i32_0 = arith.constant 0 : i32
    %c0_i32_1 = arith.constant 0 : i32
    return %c0_i32, %c0_i32_0 : i32, i32
  }
  func.func @transform_10(%arg0: i32) -> (i32, i32) {
    %c0_i32 = arith.constant 0 : i32
    %c0_i32_0 = arith.constant 0 : i32
    %c0_i32_1 = arith.constant 0 : i32
    return %c0_i32, %c0_i32_0 : i32, i32
  }
  func.func @transform_11(%arg0: i32) -> (i32, i32) {
    %c0_i32 = arith.constant 0 : i32
    %c0_i32_0 = arith.constant 0 : i32
    %c0_i32_1 = arith.constant 0 : i32
    return %c0_i32, %c0_i32_0 : i32, i32
  }
  func.func @transform_12(%arg0: i32) -> (i32, i32) {
    %c0_i32 = arith.constant 0 : i32
    %c0_i32_0 = arith.constant 0 : i32
    %c0_i32_1 = arith.constant 0 : i32
    return %c0_i32, %c0_i32_0 : i32, i32
  }
  func.func @transform_13(%arg0: i32) -> (i32, i32) {
    %c0_i32 = arith.constant 0 : i32
    %c0_i32_0 = arith.constant 0 : i32
    return %arg0, %c0_i32 : i32, i32
  }
}

</mosaic_0001>

<llo_original>
// kernel: gmlp_forward.3
$region0: #{gmlp_forward.3}
  #allocation0 [shape = 'u32[]', space=smem, size = 0x4, offset = 0x4, fixed_abs, tag = 'smem constant byte address 0x4 - core index']
  #allocation1 [shape = 'u32[72,128]{1,0:T(1,128)}', space=vmem, size = 0x9000, scoped, tag = 'internal scratch']
  %s0 = inlined_call_operand.vmem [shape: f32[16,128], index: 0, kind: input, shape index: {}]
  %s1 = inlined_call_operand.vmem [shape: f32[1,128], index: 1, kind: input, shape index: {}]
  %s2 = inlined_call_operand.vmem [shape: f32[1,128], index: 2, kind: input, shape index: {}]
  %s3 = inlined_call_operand.vmem [shape: bf16[128,256], index: 3, kind: input, shape index: {}]
  %s4 = inlined_call_operand.vmem [shape: f32[1,256], index: 4, kind: input, shape index: {}]
  %s5 = inlined_call_operand.vmem [shape: bf16[128,256], index: 5, kind: input, shape index: {}]
  %s6 = inlined_call_operand.vmem [shape: f32[1,256], index: 6, kind: input, shape index: {}]
  %s7 = inlined_call_operand.vmem [shape: f32[1,256], index: 7, kind: input, shape index: {}]
  %s8 = inlined_call_operand.vmem [shape: f32[1,256], index: 8, kind: input, shape index: {}]
  %s9 = inlined_call_operand.vmem [shape: bf16[16,16], index: 9, kind: input, shape index: {}]
  %s10 = inlined_call_operand.vmem [shape: f32[16,256], index: 10, kind: input, shape index: {}]
  %s11 = inlined_call_operand.vmem [shape: bf16[256,128], index: 11, kind: input, shape index: {}]
  %s12 = inlined_call_operand.vmem [shape: f32[1,128], index: 12, kind: input, shape index: {}]
  %s13 = inlined_call_operand.hbm [shape: f32[16,128], index: 13, kind: output, shape index: {}]
  %s14 = sld [smem:[#allocation0]]
  $region62: #{gmlp_forward.3} parent=0
    _
  %s16 = ssub.s32 1, %s14
  %s17 = scalar_select 0, %s16, %s14
  $region1: #{gmlp_forward.3} parent=0
    #allocation2 [shape = 'u8[8192]{0}', space=vmem, size = 0x2000, scoped, tag = 'output window, operand 0, single buffered']
    #allocation3 [shape = 's32[1]{0}', space=sflag, size = 0x4, scoped, tag = 'scoped memory for gmlp_forward.3']
    %18 = vsyncpa [#allocation3], 0
    // Predicated region
    $region2: #{gmlp_forward.3} parent=1 // pred_check
      _
    $region3: #{gmlp_forward.3} parent=1 // pred_check_branch
      %20 = sbr.rel (0) target = $region5
    $region4: #{gmlp_forward.3} parent=1 // pred_region
      _
    $region5: #{gmlp_forward.3} parent=1 // pred_fallthru
      _
    // Predicated region
    $region6: #{gmlp_forward.3} parent=1 // pred_check
      _
    $region7: #{gmlp_forward.3} parent=1 // pred_check_branch
      %22 = sbr.rel (0) target = $region9
    $region8: #{gmlp_forward.3} parent=1 // pred_region
      _
    $region9: #{gmlp_forward.3} parent=1 // pred_fallthru
      _
    // Predicated region
    $region10: #{gmlp_forward.3} parent=1 // pred_check
      _
    $region11: #{gmlp_forward.3} parent=1 // pred_check_branch
      %24 = sbr.rel (0) target = $region13
    $region12: #{gmlp_forward.3} parent=1 // pred_region
      _
    $region13: #{gmlp_forward.3} parent=1 // pred_fallthru
      _
    // Predicated region
    $region14: #{gmlp_forward.3} parent=1 // pred_check
      _
    $region15: #{gmlp_forward.3} parent=1 // pred_check_branch
      %26 = sbr.rel (0) target = $region17
    $region16: #{gmlp_forward.3} parent=1 // pred_region
      _
    $region17: #{gmlp_forward.3} parent=1 // pred_fallthru
      _
    // Predicated region
    $region18: #{gmlp_forward.3} parent=1 // pred_check
      _
    $region19: #{gmlp_forward.3} parent=1 // pred_check_branch
      %28 = sbr.rel (0) target = $region21
    $region20: #{gmlp_forward.3} parent=1 // pred_region
      _
    $region21: #{gmlp_forward.3} parent=1 // pred_fallthru
      _
    // Predicated region
    $region22: #{gmlp_forward.3} parent=1 // pred_check
      _
    $region23: #{gmlp_forward.3} parent=1 // pred_check_branch
      %30 = sbr.rel (0) target = $region25
    $region24: #{gmlp_forward.3} parent=1 // pred_region
      _
    $region25: #{gmlp_forward.3} parent=1 // pred_fallthru
      _
    // Predicated region
    $region26: #{gmlp_forward.3} parent=1 // pred_check
      _
    $region27: #{gmlp_forward.3} parent=1 // pred_check_branch
      %32 = sbr.rel (0) target = $region29
    $region28: #{gmlp_forward.3} parent=1 // pred_region
      _
    $region29: #{gmlp_forward.3} parent=1 // pred_fallthru
      _
    // Predicated region
    $region30: #{gmlp_forward.3} parent=1 // pred_check
      _
    $region31: #{gmlp_forward.3} parent=1 // pred_check_branch
      %34 = sbr.rel (0) target = $region33
    $region32: #{gmlp_forward.3} parent=1 // pred_region
      _
    $region33: #{gmlp_forward.3} parent=1 // pred_fallthru
      _
    // Predicated region
    $region34: #{gmlp_forward.3} parent=1 // pred_check
      _
    $region35: #{gmlp_forward.3} parent=1 // pred_check_branch
      %36 = sbr.rel (0) target = $region37
    $region36: #{gmlp_forward.3} parent=1 // pred_region
      _
    $region37: #{gmlp_forward.3} parent=1 // pred_fallthru
      _
    // Predicated region
    $region38: #{gmlp_forward.3} parent=1 // pred_check
      _
    $region39: #{gmlp_forward.3} parent=1 // pred_check_branch
      %38 = sbr.rel (0) target = $region41
    $region40: #{gmlp_forward.3} parent=1 // pred_region
      _
    $region41: #{gmlp_forward.3} parent=1 // pred_fallthru
      _
    // Predicated region
    $region42: #{gmlp_forward.3} parent=1 // pred_check
      _
    $region43: #{gmlp_forward.3} parent=1 // pred_check_branch
      %40 = sbr.rel (0) target = $region45
    $region44: #{gmlp_forward.3} parent=1 // pred_region
      _
    $region45: #{gmlp_forward.3} parent=1 // pred_fallthru
      _
    // Predicated region
    $region46: #{gmlp_forward.3} parent=1 // pred_check
      _
    $region47: #{gmlp_forward.3} parent=1 // pred_check_branch
      %42 = sbr.rel (0) target = $region49
    $region48: #{gmlp_forward.3} parent=1 // pred_region
      _
    $region49: #{gmlp_forward.3} parent=1 // pred_fallthru
      _
    // Predicated region
    $region50: #{gmlp_forward.3} parent=1 // pred_check
      _
    $region51: #{gmlp_forward.3} parent=1 // pred_check_branch
      %44 = sbr.rel (0) target = $region53
    $region52: #{gmlp_forward.3} parent=1 // pred_region
      _
    $region53: #{gmlp_forward.3} parent=1 // pred_fallthru
      _
    %v46 = vld [vmem:[%s0] sm:$0xff]
    %v47 = vld [vmem:[%s0 + $0x8] sm:$0xff]
    %v48 = vld [vmem:[%s1] sm:$0x1]
    %v49 = vld [vmem:[%s2] sm:$0x1]
    %50 = vadd.xlane.f32.xlu0 %v46
    %v51 = vpop.xlane.xlu0 %50
    %52 = vadd.xlane.f32.xlu0 %v47
    %v53 = vpop.xlane.xlu0 %52
    %v54 = vrcp.pop 128.0
    %v55 = vmul.f32 128.0, %v54
    %v56 = vsub.f32 1.0, %v55
    %v57 = vmul.f32 %v54, %v56
    %v58 = vadd.f32 %v54, %v57
    %vm59 = vweird.f32 %v54
    %v60 = vsel %vm59, %v54, %v58
    %v61 = vmul.f32 %v51, %v60
    %v62 = vmul.f32 %v53, %v60
    %v63 = vmul.f32 %v46, %v46
    %v64 = vmul.f32 %v47, %v47
    %65 = vadd.xlane.f32.xlu0 %v63
    %v66 = vpop.xlane.xlu0 %65
    %67 = vadd.xlane.f32.xlu0 %v64
    %v68 = vpop.xlane.xlu0 %67
    %v69 = vmul.f32 %v66, %v60
    %v70 = vmul.f32 %v68, %v60
    %v71 = vmul.f32 %v61, %v61
    %v72 = vmul.f32 %v62, %v62
    %v73 = vsub.f32 %v69, %v71
    %v74 = vsub.f32 %v70, %v72
    %v75 = vmax.f32 %v73, 0.0
    %v76 = vmax.f32 %v74, 0.0
    %v77 = vsub.f32 %v46, %v61
    %v78 = vsub.f32 %v47, %v62
    %v79 = vadd.f32 %v75, 1e-05
    %v80 = vadd.f32 %v76, 1e-05
    %v81 = vrsqrt.pop %v79
    %v82 = vmul.f32 %v81, %v79
    %v83 = vmul.f32 %v82, %v81
    %v84 = vmul.f32 0.5, %v83
    %v85 = vsub.f32 1.5, %v84
    %v86 = vmul.f32 %v81, %v85
    %vm87 = vweird.f32 %v79
    %vm88 = vweird.f32 %v81
    %vm89 = vmor %vm87, %vm88
    %v90 = vsel %vm89, %v81, %v86
    %v91 = vrsqrt.pop %v80
    %v92 = vmul.f32 %v91, %v80
    %v93 = vmul.f32 %v92, %v91
    %v94 = vmul.f32 0.5, %v93
    %v95 = vsub.f32 1.5, %v94
    %v96 = vmul.f32 %v91, %v95
    %vm97 = vweird.f32 %v80
    %vm98 = vweird.f32 %v91
    %vm99 = vmor %vm97, %vm98
    %v100 = vsel %vm99, %v91, %v96
    %v101 = vmul.f32 %v77, %v90
    %v102 = vmul.f32 %v78, %v100
    %v104 = vperm.slane %v48, 0
    %v106 = vmul.f32 %v101, %v104
    %v107 = vmul.f32 %v102, %v104
    %v109 = vperm.slane %v49, 0
    %v111 = vadd.f32 %v106, %v109
    %v112 = vadd.f32 %v107, %v109
    %v113 = vpack.c.bf16 %v112, %v111
    %v114 = vld [vmem:[%s3] sm:$0xff]
    %v115 = vld [vmem:[%s3 + $0x8] sm:$0xff]
    %v116 = vld [vmem:[%s3 + $0x10] sm:$0xff]
    %v117 = vld [vmem:[%s3 + $0x18] sm:$0xff]
    %v118 = vld [vmem:[%s3 + $0x20] sm:$0xff]
    %v119 = vld [vmem:[%s3 + $0x28] sm:$0xff]
    %v120 = vld [vmem:[%s3 + $0x30] sm:$0xff]
    %v121 = vld [vmem:[%s3 + $0x38] sm:$0xff]
    %v122 = vld [vmem:[%s3 + $0x40] sm:$0xff]
    %v123 = vld [vmem:[%s3 + $0x48] sm:$0xff]
    %v124 = vld [vmem:[%s3 + $0x50] sm:$0xff]
    %v125 = vld [vmem:[%s3 + $0x58] sm:$0xff]
    %v126 = vld [vmem:[%s3 + $0x60] sm:$0xff]
    %v127 = vld [vmem:[%s3 + $0x68] sm:$0xff]
    %v128 = vld [vmem:[%s3 + $0x70] sm:$0xff]
    %v129 = vld [vmem:[%s3 + $0x78] sm:$0xff]
    %v130 = vld [vmem:[%s4] sm:$0x3]
    %v132 = vperm.slane %v130, 0
    %v133 = vperm.slane %v130, 1
    %v152 = vunpack.c.l.b16 %v114
    %v153 = vunpack.c.h.b16 %v114
    %v154 = vunpack.c.l.b16 %v115
    %v155 = vunpack.c.h.b16 %v115
    %v156 = vunpack.c.l.b16 %v116
    %v157 = vunpack.c.h.b16 %v116
    %v158 = vunpack.c.l.b16 %v117
    %v159 = vunpack.c.h.b16 %v117
    %v160 = vunpack.c.l.b16 %v118
    %v161 = vunpack.c.h.b16 %v118
    %v162 = vunpack.c.l.b16 %v119
    %v163 = vunpack.c.h.b16 %v119
    %v164 = vunpack.c.l.b16 %v120
    %v165 = vunpack.c.h.b16 %v120
    %v166 = vunpack.c.l.b16 %v121
    %v167 = vunpack.c.h.b16 %v121
    %v168 = vunpack.c.l.b16 %v122
    %v169 = vunpack.c.h.b16 %v122
    %v170 = vunpack.c.l.b16 %v123
    %v171 = vunpack.c.h.b16 %v123
    %v172 = vunpack.c.l.b16 %v124
    %v173 = vunpack.c.h.b16 %v124
    %v174 = vunpack.c.l.b16 %v125
    %v175 = vunpack.c.h.b16 %v125
    %v176 = vunpack.c.l.b16 %v126
    %v177 = vunpack.c.h.b16 %v126
    %v178 = vunpack.c.l.b16 %v127
    %v179 = vunpack.c.h.b16 %v127
    %v180 = vunpack.c.l.b16 %v128
    %v181 = vunpack.c.h.b16 %v128
    %v182 = vunpack.c.l.b16 %v129
    %v183 = vunpack.c.h.b16 %v129
    %v184 = vpack.c.b16 %v154, %v152
    %v185 = vpack.c.b16 %v155, %v153
    %v186 = vpack.c.b16 %v158, %v156
    %v187 = vpack.c.b16 %v159, %v157
    %v188 = vpack.c.b16 %v162, %v160
    %v189 = vpack.c.b16 %v163, %v161
    %v190 = vpack.c.b16 %v166, %v164
    %v191 = vpack.c.b16 %v167, %v165
    %v192 = vpack.c.b16 %v170, %v168
    %v193 = vpack.c.b16 %v171, %v169
    %v194 = vpack.c.b16 %v174, %v172
    %v195 = vpack.c.b16 %v175, %v173
    %v196 = vpack.c.b16 %v178, %v176
    %v197 = vpack.c.b16 %v179, %v177
    %v198 = vpack.c.b16 %v182, %v180
    %v199 = vpack.c.b16 %v183, %v181
    %216 = vmatpush.bf16.msra.mxu0 %v198
    %217 = vmatpush.bf16.msra.mxu0 %v196
    %218 = vmatpush.bf16.msra.mxu0 %v194
    %219 = vmatpush.bf16.msra.mxu0 %v192
    %220 = vmatpush.bf16.msra.mxu0 %v190
    %221 = vmatpush.bf16.msra.mxu0 %v188
    %222 = vmatpush.bf16.msra.mxu0 %v186
    %223 = vmatpush.bf16.msra.mxu0 %v184
    %224 = vmatmul.bf16.gmra.mxu0 %v113
    %v225 = vpop.f32.mrf.mxu0
    %v226 = vadd.f32 %v132, %v225
    %v227 = vpop.f32.mrf.mxu0
    %v228 = vadd.f32 %v132, %v227
    %229 = vdwg.mxu0
    %230 = vmatpush.bf16.msra.mxu0 %v199
    %231 = vmatpush.bf16.msra.mxu0 %v197
    %232 = vmatpush.bf16.msra.mxu0 %v195
    %233 = vmatpush.bf16.msra.mxu0 %v193
    %234 = vmatpush.bf16.msra.mxu0 %v191
    %235 = vmatpush.bf16.msra.mxu0 %v189
    %236 = vmatpush.bf16.msra.mxu0 %v187
    %237 = vmatpush.bf16.msra.mxu0 %v185
    %238 = vmatmul.bf16.gmra.mxu0 %v113
    %v239 = vpop.f32.mrf.mxu0
    %v240 = vadd.f32 %v133, %v239
    %v241 = vpop.f32.mrf.mxu0
    %v242 = vadd.f32 %v133, %v241
    %243 = vdwg.mxu0
    %v244 = vld [vmem:[%s5] sm:$0xff]
    %v245 = vld [vmem:[%s5 + $0x8] sm:$0xff]
    %v246 = vld [vmem:[%s5 + $0x10] sm:$0xff]
    %v247 = vld [vmem:[%s5 + $0x18] sm:$0xff]
    %v248 = vld [vmem:[%s5 + $0x20] sm:$0xff]
    %v249 = vld [vmem:[%s5 + $0x28] sm:$0xff]
    %v250 = vld [vmem:[%s5 + $0x30] sm:$0xff]
    %v251 = vld [vmem:[%s5 + $0x38] sm:$0xff]
    %v252 = vld [vmem:[%s5 + $0x40] sm:$0xff]
    %v253 = vld [vmem:[%s5 + $0x48] sm:$0xff]
    %v254 = vld [vmem:[%s5 + $0x50] sm:$0xff]
    %v255 = vld [vmem:[%s5 + $0x58] sm:$0xff]
    %v256 = vld [vmem:[%s5 + $0x60] sm:$0xff]
    %v257 = vld [vmem:[%s5 + $0x68] sm:$0xff]
    %v258 = vld [vmem:[%s5 + $0x70] sm:$0xff]
    %v259 = vld [vmem:[%s5 + $0x78] sm:$0xff]
    %v260 = vld [vmem:[%s6] sm:$0x3]
    %v262 = vperm.slane %v260, 0
    %v263 = vperm.slane %v260, 1
    %v282 = vunpack.c.l.b16 %v244
    %v283 = vunpack.c.h.b16 %v244
    %v284 = vunpack.c.l.b16 %v245
    %v285 = vunpack.c.h.b16 %v245
    %v286 = vunpack.c.l.b16 %v246
    %v287 = vunpack.c.h.b16 %v246
    %v288 = vunpack.c.l.b16 %v247
    %v289 = vunpack.c.h.b16 %v247
    %v290 = vunpack.c.l.b16 %v248
    %v291 = vunpack.c.h.b16 %v248
    %v292 = vunpack.c.l.b16 %v249
    %v293 = vunpack.c.h.b16 %v249
    %v294 = vunpack.c.l.b16 %v250
    %v295 = vunpack.c.h.b16 %v250
    %v296 = vunpack.c.l.b16 %v251
    %v297 = vunpack.c.h.b16 %v251
    %v298 = vunpack.c.l.b16 %v252
    %v299 = vunpack.c.h.b16 %v252
    %v300 = vunpack.c.l.b16 %v253
    %v301 = vunpack.c.h.b16 %v253
    %v302 = vunpack.c.l.b16 %v254
    %v303 = vunpack.c.h.b16 %v254
    %v304 = vunpack.c.l.b16 %v255
    %v305 = vunpack.c.h.b16 %v255
    %v306 = vunpack.c.l.b16 %v256
    %v307 = vunpack.c.h.b16 %v256
    %v308 = vunpack.c.l.b16 %v257
    %v309 = vunpack.c.h.b16 %v257
    %v310 = vunpack.c.l.b16 %v258
    %v311 = vunpack.c.h.b16 %v258
    %v312 = vunpack.c.l.b16 %v259
    %v313 = vunpack.c.h.b16 %v259
    %v314 = vpack.c.b16 %v284, %v282
    %v315 = vpack.c.b16 %v285, %v283
    %v316 = vpack.c.b16 %v288, %v286
    %v317 = vpack.c.b16 %v289, %v287
    %v318 = vpack.c.b16 %v292, %v290
    %v319 = vpack.c.b16 %v293, %v291
    %v320 = vpack.c.b16 %v296, %v294
    %v321 = vpack.c.b16 %v297, %v295
    %v322 = vpack.c.b16 %v300, %v298
    %v323 = vpack.c.b16 %v301, %v299
    %v324 = vpack.c.b16 %v304, %v302
    %v325 = vpack.c.b16 %v305, %v303
    %v326 = vpack.c.b16 %v308, %v306
    %v327 = vpack.c.b16 %v309, %v307
    %v328 = vpack.c.b16 %v312, %v310
    %v329 = vpack.c.b16 %v313, %v311
    %346 = vmatpush.bf16.msra.mxu0 %v328
    %347 = vmatpush.bf16.msra.mxu0 %v326
    %348 = vmatpush.bf16.msra.mxu0 %v324
    %349 = vmatpush.bf16.msra.mxu0 %v322
    %350 = vmatpush.bf16.msra.mxu0 %v320
    %351 = vmatpush.bf16.msra.mxu0 %v318
    %352 = vmatpush.bf16.msra.mxu0 %v316
    %353 = vmatpush.bf16.msra.mxu0 %v314
    %354 = vmatmul.bf16.gmra.mxu0 %v113
    %v355 = vpop.f32.mrf.mxu0
    %v356 = vadd.f32 %v262, %v355
    %v357 = vpop.f32.mrf.mxu0
    %v358 = vadd.f32 %v262, %v357
    %359 = vdwg.mxu0
    %360 = vmatpush.bf16.msra.mxu0 %v329
    %361 = vmatpush.bf16.msra.mxu0 %v327
    %362 = vmatpush.bf16.msra.mxu0 %v325
    %363 = vmatpush.bf16.msra.mxu0 %v323
    %364 = vmatpush.bf16.msra.mxu0 %v321
    %365 = vmatpush.bf16.msra.mxu0 %v319
    %366 = vmatpush.bf16.msra.mxu0 %v317
    %367 = vmatpush.bf16.msra.mxu0 %v315
    %368 = vmatmul.bf16.gmra.mxu0 %v113
    %v369 = vpop.f32.mrf.mxu0
    %v370 = vadd.f32 %v263, %v369
    %v371 = vpop.f32.mrf.mxu0
    %v372 = vadd.f32 %v263, %v371
    %373 = vdwg.mxu0
    %v374 = vmul.f32 %v226, %v226
    %v375 = vmul.f32 %v240, %v240
    %v376 = vmul.f32 %v228, %v228
    %v377 = vmul.f32 %v242, %v242
    %v378 = vmul.f32 %v374, %v226
    %v379 = vmul.f32 %v375, %v240
    %v380 = vmul.f32 %v376, %v228
    %v381 = vmul.f32 %v377, %v242
    %v382 = vmul.f32 %v378, 0.044715
    %v383 = vmul.f32 %v379, 0.044715
    %v384 = vmul.f32 %v380, 0.044715
    %v385 = vmul.f32 %v381, 0.044715
    %v386 = vadd.f32 %v226, %v382
    %v387 = vadd.f32 %v240, %v383
    %v388 = vadd.f32 %v228, %v384
    %v389 = vadd.f32 %v242, %v385
    %v390 = vmul.f32 %v386, 0.7978846
    %v391 = vmul.f32 %v387, 0.7978846
    %v392 = vmul.f32 %v388, 0.7978846
    %v393 = vmul.f32 %v389, 0.7978846
    %v394 = vtanh.pop %v390
    %v395 = vtanh.pop %v391
    %v396 = vtanh.pop %v392
    %v397 = vtanh.pop %v393
    %v398 = vmul.f32 %v226, 0.5
    %v399 = vmul.f32 %v240, 0.5
    %v400 = vmul.f32 %v228, 0.5
    %v401 = vmul.f32 %v242, 0.5
    %v402 = vadd.f32 %v394, 1.0
    %v403 = vadd.f32 %v395, 1.0
    %v404 = vadd.f32 %v396, 1.0
    %v405 = vadd.f32 %v397, 1.0
    %v406 = vmul.f32 %v398, %v402
    %v407 = vmul.f32 %v399, %v403
    %v408 = vmul.f32 %v400, %v404
    %v409 = vmul.f32 %v401, %v405
    %v410 = vmul.f32 %v356, %v356
    %v411 = vmul.f32 %v370, %v370
    %v412 = vmul.f32 %v358, %v358
    %v413 = vmul.f32 %v372, %v372
    %v414 = vmul.f32 %v410, %v356
    %v415 = vmul.f32 %v411, %v370
    %v416 = vmul.f32 %v412, %v358
    %v417 = vmul.f32 %v413, %v372
    %v418 = vmul.f32 %v414, 0.044715
    %v419 = vmul.f32 %v415, 0.044715
    %v420 = vmul.f32 %v416, 0.044715
    %v421 = vmul.f32 %v417, 0.044715
    %v422 = vadd.f32 %v356, %v418
    %v423 = vadd.f32 %v370, %v419
    %v424 = vadd.f32 %v358, %v420
    %v425 = vadd.f32 %v372, %v421
    %v426 = vmul.f32 %v422, 0.7978846
    %v427 = vmul.f32 %v423, 0.7978846
    %v428 = vmul.f32 %v424, 0.7978846
    %v429 = vmul.f32 %v425, 0.7978846
    %v430 = vtanh.pop %v426
    %v431 = vtanh.pop %v427
    %v432 = vtanh.pop %v428
    %v433 = vtanh.pop %v429
    %v434 = vmul.f32 %v356, 0.5
    %v435 = vmul.f32 %v370, 0.5
    %v436 = vmul.f32 %v358, 0.5
    %v437 = vmul.f32 %v372, 0.5
    %v438 = vadd.f32 %v430, 1.0
    %v439 = vadd.f32 %v431, 1.0
    %v440 = vadd.f32 %v432, 1.0
    %v441 = vadd.f32 %v433, 1.0
    %v442 = vmul.f32 %v434, %v438
    %v443 = vmul.f32 %v435, %v439
    %v444 = vmul.f32 %v436, %v440
    %v445 = vmul.f32 %v437, %v441
    %v446 = vld [vmem:[%s7] sm:$0x3]
    %v447 = vld [vmem:[%s8] sm:$0x3]
    %v448 = vadd.f32 %v442, %v443
    %449 = vadd.xlane.f32.xlu0 %v448
    %v450 = vpop.xlane.xlu0 %449
    %v451 = vadd.f32 %v444, %v445
    %452 = vadd.xlane.f32.xlu0 %v451
    %v453 = vpop.xlane.xlu0 %452
    %v454 = vrcp.pop 256.0
    %v455 = vmul.f32 256.0, %v454
    %v456 = vsub.f32 1.0, %v455
    %v457 = vmul.f32 %v454, %v456
    %v458 = vadd.f32 %v454, %v457
    %vm459 = vweird.f32 %v454
    %v460 = vsel %vm459, %v454, %v458
    %v461 = vmul.f32 %v450, %v460
    %v462 = vmul.f32 %v453, %v460
    %v463 = vmul.f32 %v442, %v442
    %v464 = vmul.f32 %v443, %v443
    %v465 = vmul.f32 %v444, %v444
    %v466 = vmul.f32 %v445, %v445
    %v467 = vadd.f32 %v463, %v464
    %468 = vadd.xlane.f32.xlu0 %v467
    %v469 = vpop.xlane.xlu0 %468
    %v470 = vadd.f32 %v465, %v466
    %471 = vadd.xlane.f32.xlu0 %v470
    %v472 = vpop.xlane.xlu0 %471
    %v473 = vmul.f32 %v469, %v460
    %v474 = vmul.f32 %v472, %v460
    %v475 = vmul.f32 %v461, %v461
    %v476 = vmul.f32 %v462, %v462
    %v477 = vsub.f32 %v473, %v475
    %v478 = vsub.f32 %v474, %v476
    %v479 = vmax.f32 %v477, 0.0
    %v480 = vmax.f32 %v478, 0.0
    %v481 = vsub.f32 %v442, %v461
    %v482 = vsub.f32 %v443, %v461
    %v483 = vsub.f32 %v444, %v462
    %v484 = vsub.f32 %v445, %v462
    %v485 = vadd.f32 %v479, 1e-05
    %v486 = vadd.f32 %v480, 1e-05
    %v487 = vrsqrt.pop %v485
    %v488 = vmul.f32 %v487, %v485
    %v489 = vmul.f32 %v488, %v487
    %v490 = vmul.f32 0.5, %v489
    %v491 = vsub.f32 1.5, %v490
    %v492 = vmul.f32 %v487, %v491
    %vm493 = vweird.f32 %v485
    %vm494 = vweird.f32 %v487
    %vm495 = vmor %vm493, %vm494
    %v496 = vsel %vm495, %v487, %v492
    %v497 = vrsqrt.pop %v486
    %v498 = vmul.f32 %v497, %v486
    %v499 = vmul.f32 %v498, %v497
    %v500 = vmul.f32 0.5, %v499
    %v501 = vsub.f32 1.5, %v500
    %v502 = vmul.f32 %v497, %v501
    %vm503 = vweird.f32 %v486
    %vm504 = vweird.f32 %v497
    %vm505 = vmor %vm503, %vm504
    %v506 = vsel %vm505, %v497, %v502
    %v507 = vmul.f32 %v481, %v496
    %v508 = vmul.f32 %v482, %v496
    %v509 = vmul.f32 %v483, %v506
    %v510 = vmul.f32 %v484, %v506
    %v512 = vperm.slane %v446, 0
    %v513 = vperm.slane %v446, 1
    %v516 = vmul.f32 %v507, %v512
    %v517 = vmul.f32 %v508, %v513
    %v518 = vmul.f32 %v509, %v512
    %v519 = vmul.f32 %v510, %v513
    %v521 = vperm.slane %v447, 0
    %v522 = vperm.slane %v447, 1
    %v525 = vadd.f32 %v516, %v521
    %v526 = vadd.f32 %v517, %v522
    %v527 = vadd.f32 %v518, %v521
    %v528 = vadd.f32 %v519, %v522
    %v529 = vld [vmem:[%s9] sm:$0xf]
    %v530 = vld [vmem:[%s9 + $0x4] sm:$0xf]
    %v531 = vpack.c.bf16 %v527, %v525
    %v532 = vpack.c.bf16 %v528, %v526
    %v533 = vld [vmem:[%s10] sm:$0xff]
    %v534 = vld [vmem:[%s10 + $0x8] sm:$0xff]
    %v535 = vld [vmem:[%s10 + $0x10] sm:$0xff]
    %v536 = vld [vmem:[%s10 + $0x18] sm:$0xff]
    %v539 = vunpack.c.l.b16 %v529
    %v540 = vunpack.c.l.b16 %v530
    %v541 = vpack.c.b16 %v540, %v539
    %vm542 = vcmask 130048
    %v544 = vsel %vm542, %v541, 0
    %546 = vmatpush.bf16.msra.mxu0 0
    %547 = vmatpush.bf16.msra.mxu0 0
    %548 = vmatpush.bf16.msra.mxu0 0
    %549 = vmatpush.bf16.msra.mxu0 0
    %550 = vmatpush.bf16.msra.mxu0 0
    %551 = vmatpush.bf16.msra.mxu0 0
    %552 = vmatpush.bf16.msra.mxu0 0
    %553 = vmatpush.bf16.msra.mxu0 %v531
    %554 = vmatmul.bf16.gmra.mxu0 %v544
    %v555 = vpop.f32.mrf.mxu0
    %v556 = vadd.f32 %v533, %v555
    %v557 = vpop.f32.mrf.mxu0
    %v558 = vadd.f32 %v535, %v557
    %559 = vdwg.mxu0
    %560 = vmatpush.bf16.msra.mxu0 0
    %561 = vmatpush.bf16.msra.mxu0 0
    %562 = vmatpush.bf16.msra.mxu0 0
    %563 = vmatpush.bf16.msra.mxu0 0
    %564 = vmatpush.bf16.msra.mxu0 0
    %565 = vmatpush.bf16.msra.mxu0 0
    %566 = vmatpush.bf16.msra.mxu0 0
    %567 = vmatpush.bf16.msra.mxu0 %v532
    %568 = vmatmul.bf16.gmra.mxu0 %v544
    %v569 = vpop.f32.mrf.mxu0
    %v570 = vadd.f32 %v534, %v569
    %v571 = vpop.f32.mrf.mxu0
    %v572 = vadd.f32 %v536, %v571
    %573 = vdwg.mxu0
    %v574 = vmul.f32 %v556, %v406
    %v575 = vmul.f32 %v570, %v407
    %v576 = vmul.f32 %v558, %v408
    %v577 = vmul.f32 %v572, %v409
    %v578 = vpack.c.bf16 %v576, %v574
    %v579 = vpack.c.bf16 %v577, %v575
    %v580 = vld [vmem:[%s11] sm:$0xf]
    %v581 = vld [vmem:[%s11 + $0x4] sm:$0xf]
    %v582 = vld [vmem:[%s11 + $0x8] sm:$0xf]
    %v583 = vld [vmem:[%s11 + $0xc] sm:$0xf]
    %v584 = vld [vmem:[%s11 + $0x10] sm:$0xf]
    %v585 = vld [vmem:[%s11 + $0x14] sm:$0xf]
    %v586 = vld [vmem:[%s11 + $0x18] sm:$0xf]
    %v587 = vld [vmem:[%s11 + $0x1c] sm:$0xf]
    %v588 = vld [vmem:[%s11 + $0x20] sm:$0xf]
    %v589 = vld [vmem:[%s11 + $0x24] sm:$0xf]
    %v590 = vld [vmem:[%s11 + $0x28] sm:$0xf]
    %v591 = vld [vmem:[%s11 + $0x2c] sm:$0xf]
    %v592 = vld [vmem:[%s11 + $0x30] sm:$0xf]
    %v593 = vld [vmem:[%s11 + $0x34] sm:$0xf]
    %v594 = vld [vmem:[%s11 + $0x38] sm:$0xf]
    %v595 = vld [vmem:[%s11 + $0x3c] sm:$0xf]
    %v596 = vld [vmem:[%s11 + $0x40] sm:$0xf]
    %v597 = vld [vmem:[%s11 + $0x44] sm:$0xf]
    %v598 = vld [vmem:[%s11 + $0x48] sm:$0xf]
    %v599 = vld [vmem:[%s11 + $0x4c] sm:$0xf]
    %v600 = vld [vmem:[%s11 + $0x50] sm:$0xf]
    %v601 = vld [vmem:[%s11 + $0x54] sm:$0xf]
    %v602 = vld [vmem:[%s11 + $0x58] sm:$0xf]
    %v603 = vld [vmem:[%s11 + $0x5c] sm:$0xf]
    %v604 = vld [vmem:[%s11 + $0x60] sm:$0xf]
    %v605 = vld [vmem:[%s11 + $0x64] sm:$0xf]
    %v606 = vld [vmem:[%s11 + $0x68] sm:$0xf]
    %v607 = vld [vmem:[%s11 + $0x6c] sm:$0xf]
    %v608 = vld [vmem:[%s11 + $0x70] sm:$0xf]
    %v609 = vld [vmem:[%s11 + $0x74] sm:$0xf]
    %v610 = vld [vmem:[%s11 + $0x78] sm:$0xf]
    %v611 = vld [vmem:[%s11 + $0x7c] sm:$0xf]
    %v612 = vld [vmem:[%s12] sm:$0x1]
    %v614 = vperm.slane %v612, 0
    %v648 = vunpack.c.l.b16 %v580
    %v649 = vunpack.c.l.b16 %v581
    %v650 = vunpack.c.l.b16 %v582
    %v651 = vunpack.c.l.b16 %v583
    %v652 = vunpack.c.l.b16 %v584
    %v653 = vunpack.c.l.b16 %v585
    %v654 = vunpack.c.l.b16 %v586
    %v655 = vunpack.c.l.b16 %v587
    %v656 = vunpack.c.l.b16 %v588
    %v657 = vunpack.c.l.b16 %v589
    %v658 = vunpack.c.l.b16 %v590
    %v659 = vunpack.c.l.b16 %v591
    %v660 = vunpack.c.l.b16 %v592
    %v661 = vunpack.c.l.b16 %v593
    %v662 = vunpack.c.l.b16 %v594
    %v663 = vunpack.c.l.b16 %v595
    %v664 = vunpack.c.l.b16 %v596
    %v665 = vunpack.c.l.b16 %v597
    %v666 = vunpack.c.l.b16 %v598
    %v667 = vunpack.c.l.b16 %v599
    %v668 = vunpack.c.l.b16 %v600
    %v669 = vunpack.c.l.b16 %v601
    %v670 = vunpack.c.l.b16 %v602
    %v671 = vunpack.c.l.b16 %v603
    %v672 = vunpack.c.l.b16 %v604
    %v673 = vunpack.c.l.b16 %v605
    %v674 = vunpack.c.l.b16 %v606
    %v675 = vunpack.c.l.b16 %v607
    %v676 = vunpack.c.l.b16 %v608
    %v677 = vunpack.c.l.b16 %v609
    %v678 = vunpack.c.l.b16 %v610
    %v679 = vunpack.c.l.b16 %v611
    %v680 = vpack.c.b16 %v649, %v648
    %v681 = vpack.c.b16 %v651, %v650
    %v682 = vpack.c.b16 %v653, %v652
    %v683 = vpack.c.b16 %v655, %v654
    %v684 = vpack.c.b16 %v657, %v656
    %v685 = vpack.c.b16 %v659, %v658
    %v686 = vpack.c.b16 %v661, %v660
    %v687 = vpack.c.b16 %v663, %v662
    %v688 = vpack.c.b16 %v665, %v664
    %v689 = vpack.c.b16 %v667, %v666
    %v690 = vpack.c.b16 %v669, %v668
    %v691 = vpack.c.b16 %v671, %v670
    %v692 = vpack.c.b16 %v673, %v672
    %v693 = vpack.c.b16 %v675, %v674
    %v694 = vpack.c.b16 %v677, %v676
    %v695 = vpack.c.b16 %v679, %v678
    %712 = vmatpush.bf16.msra.mxu0 %v687
    %713 = vmatpush.bf16.msra.mxu0 %v686
    %714 = vmatpush.bf16.msra.mxu0 %v685
    %715 = vmatpush.bf16.msra.mxu0 %v684
    %716 = vmatpush.bf16.msra.mxu0 %v683
    %717 = vmatpush.bf16.msra.mxu0 %v682
    %718 = vmatpush.bf16.msra.mxu0 %v681
    %719 = vmatpush.bf16.msra.mxu0 %v680
    %720 = vmatmul.bf16.gmra.mxu0 %v578
    %v721 = vpop.f32.mrf.mxu0
    %v722 = vadd.f32 %v614, %v721
    %v723 = vpop.f32.mrf.mxu0
    %v724 = vadd.f32 %v614, %v723
    %725 = vdwg.mxu0
    %726 = vmatpush.bf16.msra.mxu0 %v695
    %727 = vmatpush.bf16.msra.mxu0 %v694
    %728 = vmatpush.bf16.msra.mxu0 %v693
    %729 = vmatpush.bf16.msra.mxu0 %v692
    %730 = vmatpush.bf16.msra.mxu0 %v691
    %731 = vmatpush.bf16.msra.mxu0 %v690
    %732 = vmatpush.bf16.msra.mxu0 %v689
    %733 = vmatpush.bf16.msra.mxu0 %v688
    %734 = vmatmul.bf16.gmra.mxu0 %v579
    %v735 = vpop.f32.mrf.mxu0
    %v736 = vadd.f32 %v722, %v735
    %v737 = vpop.f32.mrf.mxu0
    %v738 = vadd.f32 %v724, %v737
    %739 = vdwg.mxu0
    %v740 = vadd.f32 %v46, %v736
    %v741 = vadd.f32 %v47, %v738
    %742 = vst [vmem:[#allocation2] sm:$0xff] %v740
    %743 = vst [vmem:[#allocation2 + $0x8] sm:$0xff] %v741
    // Predicated region
    $region54: #{gmlp_forward.3} parent=1 // pred_check
      _
    $region55: #{gmlp_forward.3} parent=1 // pred_check_branch
      %745 = sbr.rel (0) target = $region57
    $region56: #{gmlp_forward.3} parent=1 // pred_region
      %747 = vsyncadd [#allocation3], 0
      %s748 = sshll.u32 [#allocation2], 4
      %s749 = int_to_ptr.vmem [resolvable:$true] %s748
      %s750 = sshll.u32 %s13, 4
      %s751 = int_to_ptr.hbm [resolvable:$true] %s750
      %756 = dma.vmem_to_hbm [thread:$0]  %s749, 256, %s751, [#allocation3], 128, 128, 8
    $region57: #{gmlp_forward.3} parent=1 // pred_fallthru
      _
    // Predicated region
    $region58: #{gmlp_forward.3} parent=1 // pred_check
      _
    $region59: #{gmlp_forward.3} parent=1 // pred_check_branch
      %758 = sbr.rel (0) target = $region61
    $region60: #{gmlp_forward.3} parent=1 // pred_region
      %760 = dma.done [#allocation3], 256
    $region61: #{gmlp_forward.3} parent=1 // pred_fallthru
      _
    %761 = vsyncpa [#allocation3], 1

// kernel: gmlp_forward.2
$region0: #{gmlp_forward.2}
  #allocation0 [shape = 'u32[]', space=smem, size = 0x4, offset = 0x4, fixed_abs, tag = 'smem constant byte address 0x4 - core index']
  #allocation1 [shape = 'u32[72,128]{1,0:T(1,128)}', space=vmem, size = 0x9000, scoped, tag = 'internal scratch']
  %s0 = inlined_call_operand.vmem [shape: f32[16,128], index: 0, kind: input, shape index: {}]
  %s1 = inlined_call_operand.vmem [shape: f32[1,128], index: 1, kind: input, shape index: {}]
  %s2 = inlined_call_operand.vmem [shape: f32[1,128], index: 2, kind: input, shape index: {}]
  %s3 = inlined_call_operand.hbm [shape: bf16[128,256], index: 3, kind: input, shape index: {}]
  %s4 = inlined_call_operand.vmem [shape: f32[1,256], index: 4, kind: input, shape index: {}]
  %s5 = inlined_call_operand.hbm [shape: bf16[128,256], index: 5, kind: input, shape index: {}]
  %s6 = inlined_call_operand.vmem [shape: f32[1,256], index: 6, kind: input, shape index: {}]
  %s7 = inlined_call_operand.vmem [shape: f32[1,256], index: 7, kind: input, shape index: {}]
  %s8 = inlined_call_operand.vmem [shape: f32[1,256], index: 8, kind: input, shape index: {}]
  %s9 = inlined_call_operand.vmem [shape: bf16[16,16], index: 9, kind: input, shape index: {}]
  %s10 = inlined_call_operand.vmem [shape: f32[16,256], index: 10, kind: input, shape index: {}]
  %s11 = inlined_call_operand.hbm [shape: bf16[256,128], index: 11, kind: input, shape index: {}]
  %s12 = inlined_call_operand.vmem [shape: f32[1,128], index: 12, kind: input, shape index: {}]
  %s13 = inlined_call_operand.vmem [shape: f32[16,128], index: 13, kind: output, shape index: {}]
  %s14 = sld [smem:[#allocation0]]
  $region74: #{gmlp_forward.2} parent=0
    _
  %s16 = ssub.s32 1, %s14
  %s17 = scalar_select 0, %s16, %s14
  $region1: #{gmlp_forward.2} parent=0
    #allocation2 [shape = 'u8[65536]{0}', space=vmem, size = 0x10000, scoped, tag = 'input window, operand 3, single buffered']
    #allocation3 [shape = 's32[1]{0}', space=sflag, size = 0x4, scoped, tag = 'scoped memory for gmlp_forward.2']
    #allocation4 [shape = 'u8[65536]{0}', space=vmem, size = 0x10000, scoped, tag = 'input window, operand 5, single buffered']
    #allocation5 [shape = 's32[1]{0}', space=sflag, size = 0x4, scoped, tag = 'scoped memory for gmlp_forward.2']
    #allocation6 [shape = 'u8[65536]{0}', space=vmem, size = 0x10000, scoped, tag = 'input window, operand 11, single buffered']
    %18 = vsyncpa [#allocation3], 0
    %19 = vsyncpa [#allocation5], 0
    // Predicated region
    $region2: #{gmlp_forward.2} parent=1 // pred_check
      _
    $region3: #{gmlp_forward.2} parent=1 // pred_check_branch
      %21 = sbr.rel (0) target = $region5
    $region4: #{gmlp_forward.2} parent=1 // pred_region
      _
    $region5: #{gmlp_forward.2} parent=1 // pred_fallthru
      _
    // Predicated region
    $region6: #{gmlp_forward.2} parent=1 // pred_check
      _
    $region7: #{gmlp_forward.2} parent=1 // pred_check_branch
      %23 = sbr.rel (0) target = $region9
    $region8: #{gmlp_forward.2} parent=1 // pred_region
      _
    $region9: #{gmlp_forward.2} parent=1 // pred_fallthru
      _
    // Predicated region
    $region10: #{gmlp_forward.2} parent=1 // pred_check
      _
    $region11: #{gmlp_forward.2} parent=1 // pred_check_branch
      %25 = sbr.rel (0) target = $region13
    $region12: #{gmlp_forward.2} parent=1 // pred_region
      _
    $region13: #{gmlp_forward.2} parent=1 // pred_fallthru
      _
    // Predicated region
    $region14: #{gmlp_forward.2} parent=1 // pred_check
      _
    $region15: #{gmlp_forward.2} parent=1 // pred_check_branch
      %27 = sbr.rel (0) target = $region17
    $region16: #{gmlp_forward.2} parent=1 // pred_region
      %29 = vsyncadd [#allocation3], 0
      %s30 = sshll.u32 %s3, 4
      %s31 = int_to_ptr.hbm [resolvable:$true] %s30
      %s32 = sshll.u32 [#allocation2], 4
      %s33 = int_to_ptr.vmem [resolvable:$true] %s32
      %38 = dma.hbm_to_vmem [thread:$0]  %s31, 2048, %s33, [#allocation3], 128, 128, 8
    $region17: #{gmlp_forward.2} parent=1 // pred_fallthru
      _
    // Predicated region
    $region18: #{gmlp_forward.2} parent=1 // pred_check
      _
    $region19: #{gmlp_forward.2} parent=1 // pred_check_branch
      %40 = sbr.rel (0) target = $region21
    $region20: #{gmlp_forward.2} parent=1 // pred_region
      _
    $region21: #{gmlp_forward.2} parent=1 // pred_fallthru
      _
    // Predicated region
    $region22: #{gmlp_forward.2} parent=1 // pred_check
      _
    $region23: #{gmlp_forward.2} parent=1 // pred_check_branch
      %42 = sbr.rel (0) target = $region25
    $region24: #{gmlp_forward.2} parent=1 // pred_region
      %44 = vsyncadd [#allocation5], 0
      %s45 = sshll.u32 %s5, 4
      %s46 = int_to_ptr.hbm [resolvable:$true] %s45
      %s47 = sshll.u32 [#allocation4], 4
      %s48 = int_to_ptr.vmem [resolvable:$true] %s47
      %53 = dma.hbm_to_vmem [thread:$0]  %s46, 2048, %s48, [#allocation5], 128, 128, 8
    $region25: #{gmlp_forward.2} parent=1 // pred_fallthru
      _
    // Predicated region
    $region26: #{gmlp_forward.2} parent=1 // pred_check
      _
    $region27: #{gmlp_forward.2} parent=1 // pred_check_branch
      %55 = sbr.rel (0) target = $region29
    $region28: #{gmlp_forward.2} parent=1 // pred_region
      _
    $region29: #{gmlp_forward.2} parent=1 // pred_fallthru
      _
    // Predicated region
    $region30: #{gmlp_forward.2} parent=1 // pred_check
      _
    $region31: #{gmlp_forward.2} parent=1 // pred_check_branch
      %57 = sbr.rel (0) target = $region33
    $region32: #{gmlp_forward.2} parent=1 // pred_region
      _
    $region33: #{gmlp_forward.2} parent=1 // pred_fallthru
      _
    // Predicated region
    $region34: #{gmlp_forward.2} parent=1 // pred_check
      _
    $region35: #{gmlp_forward.2} parent=1 // pred_check_branch
      %59 = sbr.rel (0) target = $region37
    $region36: #{gmlp_forward.2} parent=1 // pred_region
      _
    $region37: #{gmlp_forward.2} parent=1 // pred_fallthru
      _
    // Predicated region
    $region38: #{gmlp_forward.2} parent=1 // pred_check
      _
    $region39: #{gmlp_forward.2} parent=1 // pred_check_branch
      %61 = sbr.rel (0) target = $region41
    $region40: #{gmlp_forward.2} parent=1 // pred_region
      _
    $region41: #{gmlp_forward.2} parent=1 // pred_fallthru
      _
    // Predicated region
    $region42: #{gmlp_forward.2} parent=1 // pred_check
      _
    $region43: #{gmlp_forward.2} parent=1 // pred_check_branch
      %63 = sbr.rel (0) target = $region45
    $region44: #{gmlp_forward.2} parent=1 // pred_region
      _
    $region45: #{gmlp_forward.2} parent=1 // pred_fallthru
      _
    // Predicated region
    $region46: #{gmlp_forward.2} parent=1 // pred_check
      _
    $region47: #{gmlp_forward.2} parent=1 // pred_check_branch
      %65 = sbr.rel (0) target = $region49
    $region48: #{gmlp_forward.2} parent=1 // pred_region
      %67 = vsyncadd [#allocation5], 0
      %s68 = sshll.u32 %s11, 4
      %s69 = int_to_ptr.hbm [resolvable:$true] %s68
      %s70 = sshll.u32 [#allocation6], 4
      %s71 = int_to_ptr.vmem [resolvable:$true] %s70
      %76 = dma.hbm_to_vmem [thread:$0]  %s69, 2048, %s71, [#allocation5], 64, 64, 4
    $region49: #{gmlp_forward.2} parent=1 // pred_fallthru
      _
    // Predicated region
    $region50: #{gmlp_forward.2} parent=1 // pred_check
      _
    $region51: #{gmlp_forward.2} parent=1 // pred_check_branch
      %78 = sbr.rel (0) target = $region53
    $region52: #{gmlp_forward.2} parent=1 // pred_region
      _
    $region53: #{gmlp_forward.2} parent=1 // pred_fallthru
      _
    // Predicated region
    $region54: #{gmlp_forward.2} parent=1 // pred_check
      _
    $region55: #{gmlp_forward.2} parent=1 // pred_check_branch
      %80 = sbr.rel (0) target = $region57
    $region56: #{gmlp_forward.2} parent=1 // pred_region
      %82 = dma.done [#allocation3], 2048
    $region57: #{gmlp_forward.2} parent=1 // pred_fallthru
      _
    // Predicated region
    $region58: #{gmlp_forward.2} parent=1 // pred_check
      _
    $region59: #{gmlp_forward.2} parent=1 // pred_check_branch
      %84 = sbr.rel (0) target = $region61
    $region60: #{gmlp_forward.2} parent=1 // pred_region
      %86 = dma.done [#allocation5], 2048
    $region61: #{gmlp_forward.2} parent=1 // pred_fallthru
      _
    // Predicated region
    $region62: #{gmlp_forward.2} parent=1 // pred_check
      _
    $region63: #{gmlp_forward.2} parent=1 // pred_check_branch
      %88 = sbr.rel (0) target = $region65
    $region64: #{gmlp_forward.2} parent=1 // pred_region
      %90 = dma.done [#allocation5], 2048
    $region65: #{gmlp_forward.2} parent=1 // pred_fallthru
      _
    %v92 = vld [vmem:[%s0] sm:$0xff]
    %v93 = vld [vmem:[%s0 + $0x8] sm:$0xff]
    %v94 = vld [vmem:[%s1] sm:$0x1]
    %v95 = vld [vmem:[%s2] sm:$0x1]
    %96 = vadd.xlane.f32.xlu0 %v92
    %v97 = vpop.xlane.xlu0 %96
    %98 = vadd.xlane.f32.xlu0 %v93
    %v99 = vpop.xlane.xlu0 %98
    %v100 = vrcp.pop 128.0
    %v101 = vmul.f32 128.0, %v100
    %v102 = vsub.f32 1.0, %v101
    %v103 = vmul.f32 %v100, %v102
    %v104 = vadd.f32 %v100, %v103
    %vm105 = vweird.f32 %v100
    %v106 = vsel %vm105, %v100, %v104
    %v107 = vmul.f32 %v97, %v106
    %v108 = vmul.f32 %v99, %v106
    %v109 = vmul.f32 %v92, %v92
    %v110 = vmul.f32 %v93, %v93
    %111 = vadd.xlane.f32.xlu0 %v109
    %v112 = vpop.xlane.xlu0 %111
    %113 = vadd.xlane.f32.xlu0 %v110
    %v114 = vpop.xlane.xlu0 %113
    %v115 = vmul.f32 %v112, %v106
    %v116 = vmul.f32 %v114, %v106
    %v117 = vmul.f32 %v107, %v107
    %v118 = vmul.f32 %v108, %v108
    %v119 = vsub.f32 %v115, %v117
    %v120 = vsub.f32 %v116, %v118
    %v121 = vmax.f32 %v119, 0.0
    %v122 = vmax.f32 %v120, 0.0
    %v123 = vsub.f32 %v92, %v107
    %v124 = vsub.f32 %v93, %v108
    %v125 = vadd.f32 %v121, 1e-05
    %v126 = vadd.f32 %v122, 1e-05
    %v127 = vrsqrt.pop %v125
    %v128 = vmul.f32 %v127, %v125
    %v129 = vmul.f32 %v128, %v127
    %v130 = vmul.f32 0.5, %v129
    %v131 = vsub.f32 1.5, %v130
    %v132 = vmul.f32 %v127, %v131
    %vm133 = vweird.f32 %v125
    %vm134 = vweird.f32 %v127
    %vm135 = vmor %vm133, %vm134
    %v136 = vsel %vm135, %v127, %v132
    %v137 = vrsqrt.pop %v126
    %v138 = vmul.f32 %v137, %v126
    %v139 = vmul.f32 %v138, %v137
    %v140 = vmul.f32 0.5, %v139
    %v141 = vsub.f32 1.5, %v140
    %v142 = vmul.f32 %v137, %v141
    %vm143 = vweird.f32 %v126
    %vm144 = vweird.f32 %v137
    %vm145 = vmor %vm143, %vm144
    %v146 = vsel %vm145, %v137, %v142
    %v147 = vmul.f32 %v123, %v136
    %v148 = vmul.f32 %v124, %v146
    %v150 = vperm.slane %v94, 0
    %v152 = vmul.f32 %v147, %v150
    %v153 = vmul.f32 %v148, %v150
    %v155 = vperm.slane %v95, 0
    %v157 = vadd.f32 %v152, %v155
    %v158 = vadd.f32 %v153, %v155
    %v159 = vpack.c.bf16 %v158, %v157
    %v160 = vld [vmem:[#allocation2] sm:$0xff]
    %v161 = vld [vmem:[#allocation2 + $0x8] sm:$0xff]
    %v162 = vld [vmem:[#allocation2 + $0x10] sm:$0xff]
    %v163 = vld [vmem:[#allocation2 + $0x18] sm:$0xff]
    %v164 = vld [vmem:[#allocation2 + $0x20] sm:$0xff]
    %v165 = vld [vmem:[#allocation2 + $0x28] sm:$0xff]
    %v166 = vld [vmem:[#allocation2 + $0x30] sm:$0xff]
    %v167 = vld [vmem:[#allocation2 + $0x38] sm:$0xff]
    %v168 = vld [vmem:[#allocation2 + $0x40] sm:$0xff]
    %v169 = vld [vmem:[#allocation2 + $0x48] sm:$0xff]
    %v170 = vld [vmem:[#allocation2 + $0x50] sm:$0xff]
    %v171 = vld [vmem:[#allocation2 + $0x58] sm:$0xff]
    %v172 = vld [vmem:[#allocation2 + $0x60] sm:$0xff]
    %v173 = vld [vmem:[#allocation2 + $0x68] sm:$0xff]
    %v174 = vld [vmem:[#allocation2 + $0x70] sm:$0xff]
    %v175 = vld [vmem:[#allocation2 + $0x78] sm:$0xff]
    %v176 = vld [vmem:[%s4] sm:$0x3]
    %v178 = vperm.slane %v176, 0
    %v179 = vperm.slane %v176, 1
    %v198 = vunpack.c.l.b16 %v160
    %v199 = vunpack.c.h.b16 %v160
    %v200 = vunpack.c.l.b16 %v161
    %v201 = vunpack.c.h.b16 %v161
    %v202 = vunpack.c.l.b16 %v162
    %v203 = vunpack.c.h.b16 %v162
    %v204 = vunpack.c.l.b16 %v163
    %v205 = vunpack.c.h.b16 %v163
    %v206 = vunpack.c.l.b16 %v164
    %v207 = vunpack.c.h.b16 %v164
    %v208 = vunpack.c.l.b16 %v165
    %v209 = vunpack.c.h.b16 %v165
    %v210 = vunpack.c.l.b16 %v166
    %v211 = vunpack.c.h.b16 %v166
    %v212 = vunpack.c.l.b16 %v167
    %v213 = vunpack.c.h.b16 %v167
    %v214 = vunpack.c.l.b16 %v168
    %v215 = vunpack.c.h.b16 %v168
    %v216 = vunpack.c.l.b16 %v169
    %v217 = vunpack.c.h.b16 %v169
    %v218 = vunpack.c.l.b16 %v170
    %v219 = vunpack.c.h.b16 %v170
    %v220 = vunpack.c.l.b16 %v171
    %v221 = vunpack.c.h.b16 %v171
    %v222 = vunpack.c.l.b16 %v172
    %v223 = vunpack.c.h.b16 %v172
    %v224 = vunpack.c.l.b16 %v173
    %v225 = vunpack.c.h.b16 %v173
    %v226 = vunpack.c.l.b16 %v174
    %v227 = vunpack.c.h.b16 %v174
    %v228 = vunpack.c.l.b16 %v175
    %v229 = vunpack.c.h.b16 %v175
    %v230 = vpack.c.b16 %v200, %v198
    %v231 = vpack.c.b16 %v201, %v199
    %v232 = vpack.c.b16 %v204, %v202
    %v233 = vpack.c.b16 %v205, %v203
    %v234 = vpack.c.b16 %v208, %v206
    %v235 = vpack.c.b16 %v209, %v207
    %v236 = vpack.c.b16 %v212, %v210
    %v237 = vpack.c.b16 %v213, %v211
    %v238 = vpack.c.b16 %v216, %v214
    %v239 = vpack.c.b16 %v217, %v215
    %v240 = vpack.c.b16 %v220, %v218
    %v241 = vpack.c.b16 %v221, %v219
    %v242 = vpack.c.b16 %v224, %v222
    %v243 = vpack.c.b16 %v225, %v223
    %v244 = vpack.c.b16 %v228, %v226
    %v245 = vpack.c.b16 %v229, %v227
    %262 = vmatpush.bf16.msra.mxu0 %v244
    %263 = vmatpush.bf16.msra.mxu0 %v242
    %264 = vmatpush.bf16.msra.mxu0 %v240
    %265 = vmatpush.bf16.msra.mxu0 %v238
    %266 = vmatpush.bf16.msra.mxu0 %v236
    %267 = vmatpush.bf16.msra.mxu0 %v234
    %268 = vmatpush.bf16.msra.mxu0 %v232
    %269 = vmatpush.bf16.msra.mxu0 %v230
    %270 = vmatmul.bf16.gmra.mxu0 %v159
    %v271 = vpop.f32.mrf.mxu0
    %v272 = vadd.f32 %v178, %v271
    %v273 = vpop.f32.mrf.mxu0
    %v274 = vadd.f32 %v178, %v273
    %275 = vdwg.mxu0
    %276 = vmatpush.bf16.msra.mxu0 %v245
    %277 = vmatpush.bf16.msra.mxu0 %v243
    %278 = vmatpush.bf16.msra.mxu0 %v241
    %279 = vmatpush.bf16.msra.mxu0 %v239
    %280 = vmatpush.bf16.msra.mxu0 %v237
    %281 = vmatpush.bf16.msra.mxu0 %v235
    %282 = vmatpush.bf16.msra.mxu0 %v233
    %283 = vmatpush.bf16.msra.mxu0 %v231
    %284 = vmatmul.bf16.gmra.mxu0 %v159
    %v285 = vpop.f32.mrf.mxu0
    %v286 = vadd.f32 %v179, %v285
    %v287 = vpop.f32.mrf.mxu0
    %v288 = vadd.f32 %v179, %v287
    %289 = vdwg.mxu0
    %v290 = vld [vmem:[#allocation4] sm:$0xff]
    %v291 = vld [vmem:[#allocation4 + $0x8] sm:$0xff]
    %v292 = vld [vmem:[#allocation4 + $0x10] sm:$0xff]
    %v293 = vld [vmem:[#allocation4 + $0x18] sm:$0xff]
    %v294 = vld [vmem:[#allocation4 + $0x20] sm:$0xff]
    %v295 = vld [vmem:[#allocation4 + $0x28] sm:$0xff]
    %v296 = vld [vmem:[#allocation4 + $0x30] sm:$0xff]
    %v297 = vld [vmem:[#allocation4 + $0x38] sm:$0xff]
    %v298 = vld [vmem:[#allocation4 + $0x40] sm:$0xff]
    %v299 = vld [vmem:[#allocation4 + $0x48] sm:$0xff]
    %v300 = vld [vmem:[#allocation4 + $0x50] sm:$0xff]
    %v301 = vld [vmem:[#allocation4 + $0x58] sm:$0xff]
    %v302 = vld [vmem:[#allocation4 + $0x60] sm:$0xff]
    %v303 = vld [vmem:[#allocation4 + $0x68] sm:$0xff]
    %v304 = vld [vmem:[#allocation4 + $0x70] sm:$0xff]
    %v305 = vld [vmem:[#allocation4 + $0x78] sm:$0xff]
    %v306 = vld [vmem:[%s6] sm:$0x3]
    %v308 = vperm.slane %v306, 0
    %v309 = vperm.slane %v306, 1
    %v328 = vunpack.c.l.b16 %v290
    %v329 = vunpack.c.h.b16 %v290
    %v330 = vunpack.c.l.b16 %v291
    %v331 = vunpack.c.h.b16 %v291
    %v332 = vunpack.c.l.b16 %v292
    %v333 = vunpack.c.h.b16 %v292
    %v334 = vunpack.c.l.b16 %v293
    %v335 = vunpack.c.h.b16 %v293
    %v336 = vunpack.c.l.b16 %v294
    %v337 = vunpack.c.h.b16 %v294
    %v338 = vunpack.c.l.b16 %v295
    %v339 = vunpack.c.h.b16 %v295
    %v340 = vunpack.c.l.b16 %v296
    %v341 = vunpack.c.h.b16 %v296
    %v342 = vunpack.c.l.b16 %v297
    %v343 = vunpack.c.h.b16 %v297
    %v344 = vunpack.c.l.b16 %v298
    %v345 = vunpack.c.h.b16 %v298
    %v346 = vunpack.c.l.b16 %v299
    %v347 = vunpack.c.h.b16 %v299
    %v348 = vunpack.c.l.b16 %v300
    %v349 = vunpack.c.h.b16 %v300
    %v350 = vunpack.c.l.b16 %v301
    %v351 = vunpack.c.h.b16 %v301
    %v352 = vunpack.c.l.b16 %v302
    %v353 = vunpack.c.h.b16 %v302
    %v354 = vunpack.c.l.b16 %v303
    %v355 = vunpack.c.h.b16 %v303
    %v356 = vunpack.c.l.b16 %v304
    %v357 = vunpack.c.h.b16 %v304
    %v358 = vunpack.c.l.b16 %v305
    %v359 = vunpack.c.h.b16 %v305
    %v360 = vpack.c.b16 %v330, %v328
    %v361 = vpack.c.b16 %v331, %v329
    %v362 = vpack.c.b16 %v334, %v332
    %v363 = vpack.c.b16 %v335, %v333
    %v364 = vpack.c.b16 %v338, %v336
    %v365 = vpack.c.b16 %v339, %v337
    %v366 = vpack.c.b16 %v342, %v340
    %v367 = vpack.c.b16 %v343, %v341
    %v368 = vpack.c.b16 %v346, %v344
    %v369 = vpack.c.b16 %v347, %v345
    %v370 = vpack.c.b16 %v350, %v348
    %v371 = vpack.c.b16 %v351, %v349
    %v372 = vpack.c.b16 %v354, %v352
    %v373 = vpack.c.b16 %v355, %v353
    %v374 = vpack.c.b16 %v358, %v356
    %v375 = vpack.c.b16 %v359, %v357
    %392 = vmatpush.bf16.msra.mxu0 %v374
    %393 = vmatpush.bf16.msra.mxu0 %v372
    %394 = vmatpush.bf16.msra.mxu0 %v370
    %395 = vmatpush.bf16.msra.mxu0 %v368
    %396 = vmatpush.bf16.msra.mxu0 %v366
    %397 = vmatpush.bf16.msra.mxu0 %v364
    %398 = vmatpush.bf16.msra.mxu0 %v362
    %399 = vmatpush.bf16.msra.mxu0 %v360
    %400 = vmatmul.bf16.gmra.mxu0 %v159
    %v401 = vpop.f32.mrf.mxu0
    %v402 = vadd.f32 %v308, %v401
    %v403 = vpop.f32.mrf.mxu0
    %v404 = vadd.f32 %v308, %v403
    %405 = vdwg.mxu0
    %406 = vmatpush.bf16.msra.mxu0 %v375
    %407 = vmatpush.bf16.msra.mxu0 %v373
    %408 = vmatpush.bf16.msra.mxu0 %v371
    %409 = vmatpush.bf16.msra.mxu0 %v369
    %410 = vmatpush.bf16.msra.mxu0 %v367
    %411 = vmatpush.bf16.msra.mxu0 %v365
    %412 = vmatpush.bf16.msra.mxu0 %v363
    %413 = vmatpush.bf16.msra.mxu0 %v361
    %414 = vmatmul.bf16.gmra.mxu0 %v159
    %v415 = vpop.f32.mrf.mxu0
    %v416 = vadd.f32 %v309, %v415
    %v417 = vpop.f32.mrf.mxu0
    %v418 = vadd.f32 %v309, %v417
    %419 = vdwg.mxu0
    %v420 = vmul.f32 %v272, %v272
    %v421 = vmul.f32 %v286, %v286
    %v422 = vmul.f32 %v274, %v274
    %v423 = vmul.f32 %v288, %v288
    %v424 = vmul.f32 %v420, %v272
    %v425 = vmul.f32 %v421, %v286
    %v426 = vmul.f32 %v422, %v274
    %v427 = vmul.f32 %v423, %v288
    %v428 = vmul.f32 %v424, 0.044715
    %v429 = vmul.f32 %v425, 0.044715
    %v430 = vmul.f32 %v426, 0.044715
    %v431 = vmul.f32 %v427, 0.044715
    %v432 = vadd.f32 %v272, %v428
    %v433 = vadd.f32 %v286, %v429
    %v434 = vadd.f32 %v274, %v430
    %v435 = vadd.f32 %v288, %v431
    %v436 = vmul.f32 %v432, 0.7978846
    %v437 = vmul.f32 %v433, 0.7978846
    %v438 = vmul.f32 %v434, 0.7978846
    %v439 = vmul.f32 %v435, 0.7978846
    %v440 = vtanh.pop %v436
    %v441 = vtanh.pop %v437
    %v442 = vtanh.pop %v438
    %v443 = vtanh.pop %v439
    %v444 = vmul.f32 %v272, 0.5
    %v445 = vmul.f32 %v286, 0.5
    %v446 = vmul.f32 %v274, 0.5
    %v447 = vmul.f32 %v288, 0.5
    %v448 = vadd.f32 %v440, 1.0
    %v449 = vadd.f32 %v441, 1.0
    %v450 = vadd.f32 %v442, 1.0
    %v451 = vadd.f32 %v443, 1.0
    %v452 = vmul.f32 %v444, %v448
    %v453 = vmul.f32 %v445, %v449
    %v454 = vmul.f32 %v446, %v450
    %v455 = vmul.f32 %v447, %v451
    %v456 = vmul.f32 %v402, %v402
    %v457 = vmul.f32 %v416, %v416
    %v458 = vmul.f32 %v404, %v404
    %v459 = vmul.f32 %v418, %v418
    %v460 = vmul.f32 %v456, %v402
    %v461 = vmul.f32 %v457, %v416
    %v462 = vmul.f32 %v458, %v404
    %v463 = vmul.f32 %v459, %v418
    %v464 = vmul.f32 %v460, 0.044715
    %v465 = vmul.f32 %v461, 0.044715
    %v466 = vmul.f32 %v462, 0.044715
    %v467 = vmul.f32 %v463, 0.044715
    %v468 = vadd.f32 %v402, %v464
    %v469 = vadd.f32 %v416, %v465
    %v470 = vadd.f32 %v404, %v466
    %v471 = vadd.f32 %v418, %v467
    %v472 = vmul.f32 %v468, 0.7978846
    %v473 = vmul.f32 %v469, 0.7978846
    %v474 = vmul.f32 %v470, 0.7978846
    %v475 = vmul.f32 %v471, 0.7978846
    %v476 = vtanh.pop %v472
    %v477 = vtanh.pop %v473
    %v478 = vtanh.pop %v474
    %v479 = vtanh.pop %v475
    %v480 = vmul.f32 %v402, 0.5
    %v481 = vmul.f32 %v416, 0.5
    %v482 = vmul.f32 %v404, 0.5
    %v483 = vmul.f32 %v418, 0.5
    %v484 = vadd.f32 %v476, 1.0
    %v485 = vadd.f32 %v477, 1.0
    %v486 = vadd.f32 %v478, 1.0
    %v487 = vadd.f32 %v479, 1.0
    %v488 = vmul.f32 %v480, %v484
    %v489 = vmul.f32 %v481, %v485
    %v490 = vmul.f32 %v482, %v486
    %v491 = vmul.f32 %v483, %v487
    %v492 = vld [vmem:[%s7] sm:$0x3]
    %v493 = vld [vmem:[%s8] sm:$0x3]
    %v494 = vadd.f32 %v488, %v489
    %495 = vadd.xlane.f32.xlu0 %v494
    %v496 = vpop.xlane.xlu0 %495
    %v497 = vadd.f32 %v490, %v491
    %498 = vadd.xlane.f32.xlu0 %v497
    %v499 = vpop.xlane.xlu0 %498
    %v500 = vrcp.pop 256.0
    %v501 = vmul.f32 256.0, %v500
    %v502 = vsub.f32 1.0, %v501
    %v503 = vmul.f32 %v500, %v502
    %v504 = vadd.f32 %v500, %v503
    %vm505 = vweird.f32 %v500
    %v506 = vsel %vm505, %v500, %v504
    %v507 = vmul.f32 %v496, %v506
    %v508 = vmul.f32 %v499, %v506
    %v509 = vmul.f32 %v488, %v488
    %v510 = vmul.f32 %v489, %v489
    %v511 = vmul.f32 %v490, %v490
    %v512 = vmul.f32 %v491, %v491
    %v513 = vadd.f32 %v509, %v510
    %514 = vadd.xlane.f32.xlu0 %v513
    %v515 = vpop.xlane.xlu0 %514
    %v516 = vadd.f32 %v511, %v512
    %517 = vadd.xlane.f32.xlu0 %v516
    %v518 = vpop.xlane.xlu0 %517
    %v519 = vmul.f32 %v515, %v506
    %v520 = vmul.f32 %v518, %v506
    %v521 = vmul.f32 %v507, %v507
    %v522 = vmul.f32 %v508, %v508
    %v523 = vsub.f32 %v519, %v521
    %v524 = vsub.f32 %v520, %v522
    %v525 = vmax.f32 %v523, 0.0
    %v526 = vmax.f32 %v524, 0.0
    %v527 = vsub.f32 %v488, %v507
    %v528 = vsub.f32 %v489, %v507
    %v529 = vsub.f32 %v490, %v508
    %v530 = vsub.f32 %v491, %v508
    %v531 = vadd.f32 %v525, 1e-05
    %v532 = vadd.f32 %v526, 1e-05
    %v533 = vrsqrt.pop %v531
    %v534 = vmul.f32 %v533, %v531
    %v535 = vmul.f32 %v534, %v533
    %v536 = vmul.f32 0.5, %v535
    %v537 = vsub.f32 1.5, %v536
    %v538 = vmul.f32 %v533, %v537
    %vm539 = vweird.f32 %v531
    %vm540 = vweird.f32 %v533
    %vm541 = vmor %vm539, %vm540
    %v542 = vsel %vm541, %v533, %v538
    %v543 = vrsqrt.pop %v532
    %v544 = vmul.f32 %v543, %v532
    %v545 = vmul.f32 %v544, %v543
    %v546 = vmul.f32 0.5, %v545
    %v547 = vsub.f32 1.5, %v546
    %v548 = vmul.f32 %v543, %v547
    %vm549 = vweird.f32 %v532
    %vm550 = vweird.f32 %v543
    %vm551 = vmor %vm549, %vm550
    %v552 = vsel %vm551, %v543, %v548
    %v553 = vmul.f32 %v527, %v542
    %v554 = vmul.f32 %v528, %v542
    %v555 = vmul.f32 %v529, %v552
    %v556 = vmul.f32 %v530, %v552
    %v558 = vperm.slane %v492, 0
    %v559 = vperm.slane %v492, 1
    %v562 = vmul.f32 %v553, %v558
    %v563 = vmul.f32 %v554, %v559
    %v564 = vmul.f32 %v555, %v558
    %v565 = vmul.f32 %v556, %v559
    %v567 = vperm.slane %v493, 0
    %v568 = vperm.slane %v493, 1
    %v571 = vadd.f32 %v562, %v567
    %v572 = vadd.f32 %v563, %v568
    %v573 = vadd.f32 %v564, %v567
    %v574 = vadd.f32 %v565, %v568
    %v575 = vld [vmem:[%s9] sm:$0xf]
    %v576 = vld [vmem:[%s9 + $0x4] sm:$0xf]
    %v577 = vpack.c.bf16 %v573, %v571
    %v578 = vpack.c.bf16 %v574, %v572
    %v579 = vld [vmem:[%s10] sm:$0xff]
    %v580 = vld [vmem:[%s10 + $0x8] sm:$0xff]
    %v581 = vld [vmem:[%s10 + $0x10] sm:$0xff]
    %v582 = vld [vmem:[%s10 + $0x18] sm:$0xff]
    %v585 = vunpack.c.l.b16 %v575
    %v586 = vunpack.c.l.b16 %v576
    %v587 = vpack.c.b16 %v586, %v585
    %vm588 = vcmask 130048
    %v590 = vsel %vm588, %v587, 0
    %592 = vmatpush.bf16.msra.mxu0 0
    %593 = vmatpush.bf16.msra.mxu0 0
    %594 = vmatpush.bf16.msra.mxu0 0
    %595 = vmatpush.bf16.msra.mxu0 0
    %596 = vmatpush.bf16.msra.mxu0 0
    %597 = vmatpush.bf16.msra.mxu0 0
    %598 = vmatpush.bf16.msra.mxu0 0
    %599 = vmatpush.bf16.msra.mxu0 %v577
    %600 = vmatmul.bf16.gmra.mxu0 %v590
    %v601 = vpop.f32.mrf.mxu0
    %v602 = vadd.f32 %v579, %v601
    %v603 = vpop.f32.mrf.mxu0
    %v604 = vadd.f32 %v581, %v603
    %605 = vdwg.mxu0
    %606 = vmatpush.bf16.msra.mxu0 0
    %607 = vmatpush.bf16.msra.mxu0 0
    %608 = vmatpush.bf16.msra.mxu0 0
    %609 = vmatpush.bf16.msra.mxu0 0
    %610 = vmatpush.bf16.msra.mxu0 0
    %611 = vmatpush.bf16.msra.mxu0 0
    %612 = vmatpush.bf16.msra.mxu0 0
    %613 = vmatpush.bf16.msra.mxu0 %v578
    %614 = vmatmul.bf16.gmra.mxu0 %v590
    %v615 = vpop.f32.mrf.mxu0
    %v616 = vadd.f32 %v580, %v615
    %v617 = vpop.f32.mrf.mxu0
    %v618 = vadd.f32 %v582, %v617
    %619 = vdwg.mxu0
    %v620 = vmul.f32 %v602, %v452
    %v621 = vmul.f32 %v616, %v453
    %v622 = vmul.f32 %v604, %v454
    %v623 = vmul.f32 %v618, %v455
    %v624 = vpack.c.bf16 %v622, %v620
    %v625 = vpack.c.bf16 %v623, %v621
    %v626 = vld [vmem:[#allocation6] sm:$0xf]
    %v627 = vld [vmem:[#allocation6 + $0x4] sm:$0xf]
    %v628 = vld [vmem:[#allocation6 + $0x8] sm:$0xf]
    %v629 = vld [vmem:[#allocation6 + $0xc] sm:$0xf]
    %v630 = vld [vmem:[#allocation6 + $0x10] sm:$0xf]
    %v631 = vld [vmem:[#allocation6 + $0x14] sm:$0xf]
    %v632 = vld [vmem:[#allocation6 + $0x18] sm:$0xf]
    %v633 = vld [vmem:[#allocation6 + $0x1c] sm:$0xf]
    %v634 = vld [vmem:[#allocation6 + $0x20] sm:$0xf]
    %v635 = vld [vmem:[#allocation6 + $0x24] sm:$0xf]
    %v636 = vld [vmem:[#allocation6 + $0x28] sm:$0xf]
    %v637 = vld [vmem:[#allocation6 + $0x2c] sm:$0xf]
    %v638 = vld [vmem:[#allocation6 + $0x30] sm:$0xf]
    %v639 = vld [vmem:[#allocation6 + $0x34] sm:$0xf]
    %v640 = vld [vmem:[#allocation6 + $0x38] sm:$0xf]
    %v641 = vld [vmem:[#allocation6 + $0x3c] sm:$0xf]
    %v642 = vld [vmem:[#allocation6 + $0x40] sm:$0xf]
    %v643 = vld [vmem:[#allocation6 + $0x44] sm:$0xf]
    %v644 = vld [vmem:[#allocation6 + $0x48] sm:$0xf]
    %v645 = vld [vmem:[#allocation6 + $0x4c] sm:$0xf]
    %v646 = vld [vmem:[#allocation6 + $0x50] sm:$0xf]
    %v647 = vld [vmem:[#allocation6 + $0x54] sm:$0xf]
    %v648 = vld [vmem:[#allocation6 + $0x58] sm:$0xf]
    %v649 = vld [vmem:[#allocation6 + $0x5c] sm:$0xf]
    %v650 = vld [vmem:[#allocation6 + $0x60] sm:$0xf]
    %v651 = vld [vmem:[#allocation6 + $0x64] sm:$0xf]
    %v652 = vld [vmem:[#allocation6 + $0x68] sm:$0xf]
    %v653 = vld [vmem:[#allocation6 + $0x6c] sm:$0xf]
    %v654 = vld [vmem:[#allocation6 + $0x70] sm:$0xf]
    %v655 = vld [vmem:[#allocation6 + $0x74] sm:$0xf]
    %v656 = vld [vmem:[#allocation6 + $0x78] sm:$0xf]
    %v657 = vld [vmem:[#allocation6 + $0x7c] sm:$0xf]
    %v658 = vld [vmem:[%s12] sm:$0x1]
    %v660 = vperm.slane %v658, 0
    %v694 = vunpack.c.l.b16 %v626
    %v695 = vunpack.c.l.b16 %v627
    %v696 = vunpack.c.l.b16 %v628
    %v697 = vunpack.c.l.b16 %v629
    %v698 = vunpack.c.l.b16 %v630
    %v699 = vunpack.c.l.b16 %v631
    %v700 = vunpack.c.l.b16 %v632
    %v701 = vunpack.c.l.b16 %v633
    %v702 = vunpack.c.l.b16 %v634
    %v703 = vunpack.c.l.b16 %v635
    %v704 = vunpack.c.l.b16 %v636
    %v705 = vunpack.c.l.b16 %v637
    %v706 = vunpack.c.l.b16 %v638
    %v707 = vunpack.c.l.b16 %v639
    %v708 = vunpack.c.l.b16 %v640
    %v709 = vunpack.c.l.b16 %v641
    %v710 = vunpack.c.l.b16 %v642
    %v711 = vunpack.c.l.b16 %v643
    %v712 = vunpack.c.l.b16 %v644
    %v713 = vunpack.c.l.b16 %v645
    %v714 = vunpack.c.l.b16 %v646
    %v715 = vunpack.c.l.b16 %v647
    %v716 = vunpack.c.l.b16 %v648
    %v717 = vunpack.c.l.b16 %v649
    %v718 = vunpack.c.l.b16 %v650
    %v719 = vunpack.c.l.b16 %v651
    %v720 = vunpack.c.l.b16 %v652
    %v721 = vunpack.c.l.b16 %v653
    %v722 = vunpack.c.l.b16 %v654
    %v723 = vunpack.c.l.b16 %v655
    %v724 = vunpack.c.l.b16 %v656
    %v725 = vunpack.c.l.b16 %v657
    %v726 = vpack.c.b16 %v695, %v694
    %v727 = vpack.c.b16 %v697, %v696
    %v728 = vpack.c.b16 %v699, %v698
    %v729 = vpack.c.b16 %v701, %v700
    %v730 = vpack.c.b16 %v703, %v702
    %v731 = vpack.c.b16 %v705, %v704
    %v732 = vpack.c.b16 %v707, %v706
    %v733 = vpack.c.b16 %v709, %v708
    %v734 = vpack.c.b16 %v711, %v710
    %v735 = vpack.c.b16 %v713, %v712
    %v736 = vpack.c.b16 %v715, %v714
    %v737 = vpack.c.b16 %v717, %v716
    %v738 = vpack.c.b16 %v719, %v718
    %v739 = vpack.c.b16 %v721, %v720
    %v740 = vpack.c.b16 %v723, %v722
    %v741 = vpack.c.b16 %v725, %v724
    %758 = vmatpush.bf16.msra.mxu0 %v733
    %759 = vmatpush.bf16.msra.mxu0 %v732
    %760 = vmatpush.bf16.msra.mxu0 %v731
    %761 = vmatpush.bf16.msra.mxu0 %v730
    %762 = vmatpush.bf16.msra.mxu0 %v729
    %763 = vmatpush.bf16.msra.mxu0 %v728
    %764 = vmatpush.bf16.msra.mxu0 %v727
    %765 = vmatpush.bf16.msra.mxu0 %v726
    %766 = vmatmul.bf16.gmra.mxu0 %v624
    %v767 = vpop.f32.mrf.mxu0
    %v768 = vadd.f32 %v660, %v767
    %v769 = vpop.f32.mrf.mxu0
    %v770 = vadd.f32 %v660, %v769
    %771 = vdwg.mxu0
    %772 = vmatpush.bf16.msra.mxu0 %v741
    %773 = vmatpush.bf16.msra.mxu0 %v740
    %774 = vmatpush.bf16.msra.mxu0 %v739
    %775 = vmatpush.bf16.msra.mxu0 %v738
    %776 = vmatpush.bf16.msra.mxu0 %v737
    %777 = vmatpush.bf16.msra.mxu0 %v736
    %778 = vmatpush.bf16.msra.mxu0 %v735
    %779 = vmatpush.bf16.msra.mxu0 %v734
    %780 = vmatmul.bf16.gmra.mxu0 %v625
    %v781 = vpop.f32.mrf.mxu0
    %v782 = vadd.f32 %v768, %v781
    %v783 = vpop.f32.mrf.mxu0
    %v784 = vadd.f32 %v770, %v783
    %785 = vdwg.mxu0
    %v786 = vadd.f32 %v92, %v782
    %v787 = vadd.f32 %v93, %v784
    %788 = vst [vmem:[%s13] sm:$0xff] %v786
    %789 = vst [vmem:[%s13 + $0x8] sm:$0xff] %v787
    // Predicated region
    $region66: #{gmlp_forward.2} parent=1 // pred_check
      _
    $region67: #{gmlp_forward.2} parent=1 // pred_check_branch
      %791 = sbr.rel (0) target = $region69
    $region68: #{gmlp_forward.2} parent=1 // pred_region
      _
    $region69: #{gmlp_forward.2} parent=1 // pred_fallthru
      _
    // Predicated region
    $region70: #{gmlp_forward.2} parent=1 // pred_check
      _
    $region71: #{gmlp_forward.2} parent=1 // pred_check_branch
      %793 = sbr.rel (0) target = $region73
    $region72: #{gmlp_forward.2} parent=1 // pred_region
      _
    $region73: #{gmlp_forward.2} parent=1 // pred_fallthru
      _
    %794 = vsyncpa [#allocation3], 1
    %795 = vsyncpa [#allocation5], 1

</llo_original>
